<compile_context>
chip_gen: v7x
topology: tpu7x:2x2x1
jax: 0.10.0
libtpu: 0.0.40
codegen_flags: <defaults>
</compile_context>

<pallas_src>
import jax
import jax.numpy as jnp
from jax.experimental import pallas as pl
from jax.experimental.pallas import tpu as pltpu


NEG_SLOPE = 0.01  # F.leaky_relu default negative_slope


def _round_up(n, m):
    return ((n + m - 1) // m) * m


def _leaky_relu(x):
    return jnp.where(x > 0, x, NEG_SLOPE * x)


def classify_net_kernel(x_ref, w1_ref, b1_ref, w2_ref, b2_ref, w3_ref, b3_ref,
                        o_ref):
    """Fused fc1 -> leaky_relu -> fc2 -> leaky_relu -> fc3 for one batch tile.

    x may arrive as f32 (no-padding fast path) or bf16 (padded path); it is
    cast to bf16 in-kernel right before the MXU. Accumulation, bias add and
    leaky_relu run in f32; activations are re-cast to bf16 only for the next dot.
    """
    x = x_ref[...].astype(jnp.bfloat16)                        # (TB, Dp)
    h1 = jnp.dot(x, w1_ref[...],
                 preferred_element_type=jnp.float32) + b1_ref[...]
    h1 = _leaky_relu(h1).astype(jnp.bfloat16)                  # (TB, H1p)
    h2 = jnp.dot(h1, w2_ref[...],
                 preferred_element_type=jnp.float32) + b2_ref[...]
    h2 = _leaky_relu(h2).astype(jnp.bfloat16)                  # (TB, H2p)
    y = jnp.dot(h2, w3_ref[...],
                preferred_element_type=jnp.float32) + b3_ref[...]
    # Store only the valid label columns: output last dim == num_labels (full
    # array dim), so the narrow block is legal and the HBM writeback shrinks
    # up to 16x vs. a padded Lp=128 f32 output.
    o_ref[...] = y[:, :o_ref.shape[1]].astype(o_ref.dtype)


def _vmem_limit_bytes(tile_b, Dp, H1p, H2p, Lp, num_labels, x_itemsize,
                      single_buffer_weights):
    """Size the scoped-VMEM limit from the actual working set (review item 5)."""
    lout_p = _round_up(num_labels, 128)            # lane padding of the out tile
    x_tile = 2 * tile_b * Dp * x_itemsize          # double-buffered input tile
    out_tile = 2 * tile_b * lout_p * 4             # double-buffered output tile
    weights = ((Dp * H1p + H1p * H2p + H2p * Lp) * 2   # bf16 weights
               + (H1p + H2p + Lp) * 4)                  # f32 biases
    weights *= 1 if single_buffer_weights else 2
    # f32 intermediates + bf16 recasts of the two hidden activations.
    scratch = tile_b * (H1p + H2p + Lp) * 4 + tile_b * (H1p + H2p) * 2
    need = x_tile + out_tile + weights + scratch + (4 << 20)   # + headroom

    try:   # cap at ~80% of physical VMEM (64 MiB v7x, 128 MiB v5e/v6e)
        phys = pltpu.get_tpu_info().vmem_capacity_bytes
    except Exception:
        phys = 64 << 20
    return int(max(16 << 20, min(need, int(phys * 0.8))))


def classify_net_forward(x, params, num_labels, *, tile_b=None):
    """Eval-mode forward of classfiyNet via a single fused Pallas kernel.

    params are the *padded* bf16 weights / f32 biases produced by init_params.
    Returns f32 logits of shape (B, num_labels).
    """
    w1, b1, w2, b2, w3, b3 = params
    B, D = x.shape
    Dp, H1p = w1.shape
    H2p = w2.shape[1]
    Lp = w3.shape[1]

    # ---- tile_b / grid selection (review items 3 & 6) -----------------------
    if tile_b is None:
        B_ceil = _round_up(B, 128)
        if B_ceil <= 128:
            tile_b = B_ceil                       # can't usefully split
        elif B_ceil <= 1024:
            # >= 2 grid steps so "parallel" shards over both v7x TensorCores.
            tile_b = _round_up(B_ceil // 2, 128)
        else:
            tile_b = 512
    else:
        # User override (e.g. sweep {256, 512} on v5e). Keep it MXU-friendly.
        tile_b = _round_up(tile_b, 128 if B >= 128 else 16)
    B_pad = _round_up(B, tile_b)
    grid = (B_pad // tile_b,)

    # ---- x handling (review item 1) -----------------------------------------
    needs_pad = (B_pad != B) or (Dp != D)
    if needs_pad:
        # Padding required anyway -> cast to bf16 while touching x (2 B/elem DMA).
        x_in = jnp.pad(x.astype(jnp.bfloat16), ((0, B_pad - B), (0, Dp - D)))
    else:
        # Fast path: pass x untouched; bf16 cast happens inside the kernel.
        x_in = x

    def run(single_buffer_weights):
        vmem_limit = _vmem_limit_bytes(tile_b, Dp, H1p, H2p, Lp, num_labels,
                                       x_in.dtype.itemsize, single_buffer_weights)
        # Constant-index weight/bias blocks: single-buffer them (review item 4).
        spec_kwargs = ({"pipeline_mode": pl.Buffered(1)}
                       if single_buffer_weights else {})

        def full(shape):
            return pl.BlockSpec(shape, lambda i: (0, 0), **spec_kwargs)

        return pl.pallas_call(
            classify_net_kernel,
            out_shape=jax.ShapeDtypeStruct((B_pad, num_labels), jnp.float32),
            grid_spec=pltpu.PrefetchScalarGridSpec(
                num_scalar_prefetch=0,
                grid=grid,
                in_specs=[
                    pl.BlockSpec((tile_b, Dp), lambda i: (i, 0)),  # x batch tile
                    full((Dp, H1p)),   # W1^T (bf16)
                    full((1, H1p)),    # b1   (f32)
                    full((H1p, H2p)),  # W2^T (bf16)
                    full((1, H2p)),    # b2   (f32)
                    full((H2p, Lp)),   # W3^T (bf16)
                    full((1, Lp)),     # b3   (f32)
                ],
                out_specs=pl.BlockSpec((tile_b, num_labels), lambda i: (i, 0)),
            ),
            compiler_params=pltpu.CompilerParams(
                dimension_semantics=("parallel",),
                vmem_limit_bytes=vmem_limit,
            ),
        )(x_in, w1, b1, w2, b2, w3, b3)

    try:
        out = run(single_buffer_weights=True)
    except Exception:
        # pipeline_mode=pl.Buffered(1) not supported by this JAX build ->
        # fall back to default (double) buffering of the resident weights.
        out = run(single_buffer_weights=False)

    return out if B_pad == B else out[:B]


def init_params(key, input_size, num_labels):
    """Xavier-normal weights / zero biases (matching init_params()), stored
    pre-transposed as [in, out], zero-padded to 128-lane multiples and cast to
    bf16 (weights) / f32 (biases).

    NOTE: correctness of the padded hidden/label lanes relies on the padded
    weight columns AND padded bias entries being exactly zero (leaky_relu(0)=0).
    If loading external checkpoints, zero the padded regions explicitly.
    """
    h1 = input_size // 2
    h2 = input_size // 4

    Dp = _round_up(input_size, 128)
    H1p = _round_up(h1, 128)
    H2p = _round_up(h2, 128)
    Lp = _round_up(num_labels, 128)

    def xavier_padded(k, fan_in, fan_out, in_pad, out_pad):
        std = (2.0 / (fan_in + fan_out)) ** 0.5
        w = jax.random.normal(k, (fan_in, fan_out), dtype=jnp.float32) * std
        w = jnp.pad(w, ((0, in_pad - fan_in), (0, out_pad - fan_out)))
        return w.astype(jnp.bfloat16)

    k1, k2, k3 = jax.random.split(key, 3)
    w1 = xavier_padded(k1, input_size, h1, Dp, H1p)
    b1 = jnp.zeros((1, H1p), jnp.float32)
    w2 = xavier_padded(k2, h1, h2, H1p, H2p)
    b2 = jnp.zeros((1, H2p), jnp.float32)
    w3 = xavier_padded(k3, h2, num_labels, H2p, Lp)
    b3 = jnp.zeros((1, Lp), jnp.float32)
    return (w1, b1, w2, b2, w3, b3)


def reference_forward(x, params, num_labels):
    """Pure-JAX reference using the same bf16-weights / f32-accumulate math."""
    w1, b1, w2, b2, w3, b3 = params
    Dp = w1.shape[0]
    xb = x.astype(jnp.bfloat16)
    if Dp != x.shape[1]:
        xb = jnp.pad(xb, ((0, 0), (0, Dp - x.shape[1])))
    h = jnp.dot(xb, w1, preferred_element_type=jnp.float32) + b1
    h = _leaky_relu(h).astype(jnp.bfloat16)
    h = jnp.dot(h, w2, preferred_element_type=jnp.float32) + b2
    h = _leaky_relu(h).astype(jnp.bfloat16)
    y = jnp.dot(h, w3, preferred_element_type=jnp.float32) + b3
    return y[:, :num_labels]


if __name__ == "__main__":
    input_size = 128
    num_labels = 8

    key = jax.random.PRNGKey(0)
    kx, kp = jax.random.split(key)
    params = init_params(kp, input_size, num_labels)

    # Case 1: batch not a multiple of the tile -> exercises the bf16 pad path.
    batch = 200
    x = jax.random.normal(kx, (batch, input_size), dtype=jnp.float32)
    y = jax.block_until_ready(classify_net_forward(x, params, num_labels))
    y_ref = reference_forward(x, params, num_labels)
    assert y.shape == (batch, num_labels)
    assert jnp.allclose(y, y_ref, atol=1e-2, rtol=1e-2), (
        float(jnp.max(jnp.abs(y - y_ref))))

    # Case 2: aligned batch -> no wrapper cast/pad; f32 x DMA'd, cast in-kernel,
    # grid=(2,) so both v7x TensorCores get a tile.
    batch2 = 256
    x2 = jax.random.normal(kx, (batch2, input_size), dtype=jnp.float32)
    y2 = jax.block_until_ready(classify_net_forward(x2, params, num_labels))
    y2_ref = reference_forward(x2, params, num_labels)
    assert y2.shape == (batch2, num_labels)
    assert jnp.allclose(y2, y2_ref, atol=1e-2, rtol=1e-2), (
        float(jnp.max(jnp.abs(y2 - y2_ref))))

    print("KERNEL_OK")
</pallas_src>

<mosaic_0001>
module attributes {stable_mosaic.version = 11 : i64} {
  func.func @classify_net_kernel(%arg0: i32, %arg1: memref<128x128xbf16, #tpu.memory_space<vmem>>, %arg2: memref<128x128xbf16, #tpu.memory_space<vmem>>, %arg3: memref<1x128xf32, #tpu.memory_space<vmem>>, %arg4: memref<128x128xbf16, #tpu.memory_space<vmem>>, %arg5: memref<1x128xf32, #tpu.memory_space<vmem>>, %arg6: memref<128x128xbf16, #tpu.memory_space<vmem>>, %arg7: memref<1x128xf32, #tpu.memory_space<vmem>>, %arg8: memref<128x8xf32, #tpu.memory_space<vmem>>) attributes {dimension_semantics = [#tpu.dimension_semantics<parallel>], iteration_bounds = array<i64: 2>, scalar_prefetch = 0 : i64, scratch_operands = 0 : i64, tpu.core_type = #tpu.core_type<tc>, window_params = [{transform_indices = @transform_0, window_bounds = array<i64: 128, 128>}, {pipeline_mode = #tpu.pipeline_mode<synchronous>, transform_indices = @transform_1, window_bounds = array<i64: 128, 128>}, {pipeline_mode = #tpu.pipeline_mode<synchronous>, transform_indices = @transform_2, window_bounds = array<i64: 1, 128>}, {pipeline_mode = #tpu.pipeline_mode<synchronous>, transform_indices = @transform_3, window_bounds = array<i64: 128, 128>}, {pipeline_mode = #tpu.pipeline_mode<synchronous>, transform_indices = @transform_4, window_bounds = array<i64: 1, 128>}, {pipeline_mode = #tpu.pipeline_mode<synchronous>, transform_indices = @transform_5, window_bounds = array<i64: 128, 128>}, {pipeline_mode = #tpu.pipeline_mode<synchronous>, transform_indices = @transform_6, window_bounds = array<i64: 1, 128>}, {transform_indices = @transform_7, window_bounds = array<i64: 128, 8>}]} {
    %c0 = arith.constant 0 : index
    %c0_0 = arith.constant 0 : index
    %0 = vector.load %arg1[%c0, %c0_0] : memref<128x128xbf16, #tpu.memory_space<vmem>>, vector<128x128xbf16>
    %c0_1 = arith.constant 0 : index
    %c0_2 = arith.constant 0 : index
    %1 = vector.load %arg2[%c0_1, %c0_2] : memref<128x128xbf16, #tpu.memory_space<vmem>>, vector<128x128xbf16>
    %cst = arith.constant dense<0.000000e+00> : vector<128x128xf32>
    %2 = tpu.matmul %0, %1, %cst {dimension_numbers = #tpu.dot_dimension_numbers<[1], [0], [0], [1], [0, 0, 1, 1], [], []>} : vector<128x128xbf16>, vector<128x128xbf16>, vector<128x128xf32> -> vector<128x128xf32>
    %c0_3 = arith.constant 0 : index
    %c0_4 = arith.constant 0 : index
    %3 = vector.load %arg3[%c0_3, %c0_4] : memref<1x128xf32, #tpu.memory_space<vmem>>, vector<1x128xf32>
    %4 = vector.broadcast %3 : vector<1x128xf32> to vector<128x128xf32>
    %5 = arith.addf %2, %4 : vector<128x128xf32>
    %cst_5 = arith.constant 0.000000e+00 : f32
    %6 = vector.broadcast %cst_5 : f32 to vector<128x128xf32>
    %7 = arith.cmpf ogt, %5, %6 : vector<128x128xf32>
    %cst_6 = arith.constant 0.00999999977 : f32
    %8 = vector.broadcast %cst_6 : f32 to vector<128x128xf32>
    %9 = arith.mulf %8, %5 : vector<128x128xf32>
    %10 = arith.select %7, %5, %9 : vector<128x128xi1>, vector<128x128xf32>
    %11 = arith.truncf %10 : vector<128x128xf32> to vector<128x128xbf16>
    %c0_7 = arith.constant 0 : index
    %c0_8 = arith.constant 0 : index
    %12 = vector.load %arg4[%c0_7, %c0_8] : memref<128x128xbf16, #tpu.memory_space<vmem>>, vector<128x128xbf16>
    %cst_9 = arith.constant dense<0.000000e+00> : vector<128x128xf32>
    %13 = tpu.matmul %11, %12, %cst_9 {dimension_numbers = #tpu.dot_dimension_numbers<[1], [0], [0], [1], [0, 0, 1, 1], [], []>} : vector<128x128xbf16>, vector<128x128xbf16>, vector<128x128xf32> -> vector<128x128xf32>
    %c0_10 = arith.constant 0 : index
    %c0_11 = arith.constant 0 : index
    %14 = vector.load %arg5[%c0_10, %c0_11] : memref<1x128xf32, #tpu.memory_space<vmem>>, vector<1x128xf32>
    %15 = vector.broadcast %14 : vector<1x128xf32> to vector<128x128xf32>
    %16 = arith.addf %13, %15 : vector<128x128xf32>
    %cst_12 = arith.constant 0.000000e+00 : f32
    %17 = vector.broadcast %cst_12 : f32 to vector<128x128xf32>
    %18 = arith.cmpf ogt, %16, %17 : vector<128x128xf32>
    %cst_13 = arith.constant 0.00999999977 : f32
    %19 = vector.broadcast %cst_13 : f32 to vector<128x128xf32>
    %20 = arith.mulf %19, %16 : vector<128x128xf32>
    %21 = arith.select %18, %16, %20 : vector<128x128xi1>, vector<128x128xf32>
    %22 = arith.truncf %21 : vector<128x128xf32> to vector<128x128xbf16>
    %c0_14 = arith.constant 0 : index
    %c0_15 = arith.constant 0 : index
    %23 = vector.load %arg6[%c0_14, %c0_15] : memref<128x128xbf16, #tpu.memory_space<vmem>>, vector<128x128xbf16>
    %cst_16 = arith.constant dense<0.000000e+00> : vector<128x128xf32>
    %24 = tpu.matmul %22, %23, %cst_16 {dimension_numbers = #tpu.dot_dimension_numbers<[1], [0], [0], [1], [0, 0, 1, 1], [], []>} : vector<128x128xbf16>, vector<128x128xbf16>, vector<128x128xf32> -> vector<128x128xf32>
    %c0_17 = arith.constant 0 : index
    %c0_18 = arith.constant 0 : index
    %25 = vector.load %arg7[%c0_17, %c0_18] : memref<1x128xf32, #tpu.memory_space<vmem>>, vector<1x128xf32>
    %26 = vector.broadcast %25 : vector<1x128xf32> to vector<128x128xf32>
    %27 = arith.addf %24, %26 : vector<128x128xf32>
    %28 = vector.extract_strided_slice %27 {offsets = [0, 0], sizes = [128, 8], strides = [1, 1]} : vector<128x128xf32> to vector<128x8xf32>
    %c0_19 = arith.constant 0 : index
    %c0_20 = arith.constant 0 : index
    %29 = vector.load %arg8[%c0_19, %c0_20] : memref<128x8xf32, #tpu.memory_space<vmem>>, vector<128x8xf32>
    tpu.vector_store %arg8[%c0_19, %c0_20], %28 {strides = array<i32>} : memref<128x8xf32, #tpu.memory_space<vmem>>, vector<128x8xf32>,
    return
  }
  func.func @transform_0(%arg0: i32) -> (i32, i32) {
    %c0_i32 = arith.constant 0 : i32
    %c0_i32_0 = arith.constant 0 : i32
    return %arg0, %c0_i32 : i32, i32
  }
  func.func @transform_1(%arg0: i32) -> (i32, i32) {
    %c0_i32 = arith.constant 0 : i32
    %c0_i32_0 = arith.constant 0 : i32
    %c0_i32_1 = arith.constant 0 : i32
    return %c0_i32, %c0_i32_0 : i32, i32
  }
  func.func @transform_2(%arg0: i32) -> (i32, i32) {
    %c0_i32 = arith.constant 0 : i32
    %c0_i32_0 = arith.constant 0 : i32
    %c0_i32_1 = arith.constant 0 : i32
    return %c0_i32, %c0_i32_0 : i32, i32
  }
  func.func @transform_3(%arg0: i32) -> (i32, i32) {
    %c0_i32 = arith.constant 0 : i32
    %c0_i32_0 = arith.constant 0 : i32
    %c0_i32_1 = arith.constant 0 : i32
    return %c0_i32, %c0_i32_0 : i32, i32
  }
  func.func @transform_4(%arg0: i32) -> (i32, i32) {
    %c0_i32 = arith.constant 0 : i32
    %c0_i32_0 = arith.constant 0 : i32
    %c0_i32_1 = arith.constant 0 : i32
    return %c0_i32, %c0_i32_0 : i32, i32
  }
  func.func @transform_5(%arg0: i32) -> (i32, i32) {
    %c0_i32 = arith.constant 0 : i32
    %c0_i32_0 = arith.constant 0 : i32
    %c0_i32_1 = arith.constant 0 : i32
    return %c0_i32, %c0_i32_0 : i32, i32
  }
  func.func @transform_6(%arg0: i32) -> (i32, i32) {
    %c0_i32 = arith.constant 0 : i32
    %c0_i32_0 = arith.constant 0 : i32
    %c0_i32_1 = arith.constant 0 : i32
    return %c0_i32, %c0_i32_0 : i32, i32
  }
  func.func @transform_7(%arg0: i32) -> (i32, i32) {
    %c0_i32 = arith.constant 0 : i32
    %c0_i32_0 = arith.constant 0 : i32
    return %arg0, %c0_i32 : i32, i32
  }
}

module attributes {stable_mosaic.version = 11 : i64} {
  func.func @classify_net_kernel(%arg0: i32, %arg1: memref<128x128xbf16, #tpu.memory_space<vmem>>, %arg2: memref<128x128xbf16, #tpu.memory_space<vmem>>, %arg3: memref<1x128xf32, #tpu.memory_space<vmem>>, %arg4: memref<128x128xbf16, #tpu.memory_space<vmem>>, %arg5: memref<1x128xf32, #tpu.memory_space<vmem>>, %arg6: memref<128x128xbf16, #tpu.memory_space<vmem>>, %arg7: memref<1x128xf32, #tpu.memory_space<vmem>>, %arg8: memref<128x8xf32, #tpu.memory_space<vmem>>) attributes {dimension_semantics = [#tpu.dimension_semantics<parallel>], iteration_bounds = array<i64: 2>, scalar_prefetch = 0 : i64, scratch_operands = 0 : i64, tpu.core_type = #tpu.core_type<tc>, window_params = [{transform_indices = @transform_0, window_bounds = array<i64: 128, 128>}, {pipeline_mode = #tpu.pipeline_mode<synchronous>, transform_indices = @transform_1, window_bounds = array<i64: 128, 128>}, {pipeline_mode = #tpu.pipeline_mode<synchronous>, transform_indices = @transform_2, window_bounds = array<i64: 1, 128>}, {pipeline_mode = #tpu.pipeline_mode<synchronous>, transform_indices = @transform_3, window_bounds = array<i64: 128, 128>}, {pipeline_mode = #tpu.pipeline_mode<synchronous>, transform_indices = @transform_4, window_bounds = array<i64: 1, 128>}, {pipeline_mode = #tpu.pipeline_mode<synchronous>, transform_indices = @transform_5, window_bounds = array<i64: 128, 128>}, {pipeline_mode = #tpu.pipeline_mode<synchronous>, transform_indices = @transform_6, window_bounds = array<i64: 1, 128>}, {transform_indices = @transform_7, window_bounds = array<i64: 128, 8>}]} {
    %c0 = arith.constant 0 : index
    %c0_0 = arith.constant 0 : index
    %0 = vector.load %arg1[%c0, %c0_0] : memref<128x128xbf16, #tpu.memory_space<vmem>>, vector<128x128xbf16>
    %c0_1 = arith.constant 0 : index
    %c0_2 = arith.constant 0 : index
    %1 = vector.load %arg2[%c0_1, %c0_2] : memref<128x128xbf16, #tpu.memory_space<vmem>>, vector<128x128xbf16>
    %cst = arith.constant dense<0.000000e+00> : vector<128x128xf32>
    %2 = tpu.matmul %0, %1, %cst {dimension_numbers = #tpu.dot_dimension_numbers<[1], [0], [0], [1], [0, 0, 1, 1], [], []>} : vector<128x128xbf16>, vector<128x128xbf16>, vector<128x128xf32> -> vector<128x128xf32>
    %c0_3 = arith.constant 0 : index
    %c0_4 = arith.constant 0 : index
    %3 = vector.load %arg3[%c0_3, %c0_4] : memref<1x128xf32, #tpu.memory_space<vmem>>, vector<1x128xf32>
    %4 = vector.broadcast %3 : vector<1x128xf32> to vector<128x128xf32>
    %5 = arith.addf %2, %4 : vector<128x128xf32>
    %cst_5 = arith.constant 0.000000e+00 : f32
    %6 = vector.broadcast %cst_5 : f32 to vector<128x128xf32>
    %7 = arith.cmpf ogt, %5, %6 : vector<128x128xf32>
    %cst_6 = arith.constant 0.00999999977 : f32
    %8 = vector.broadcast %cst_6 : f32 to vector<128x128xf32>
    %9 = arith.mulf %8, %5 : vector<128x128xf32>
    %10 = arith.select %7, %5, %9 : vector<128x128xi1>, vector<128x128xf32>
    %11 = arith.truncf %10 : vector<128x128xf32> to vector<128x128xbf16>
    %c0_7 = arith.constant 0 : index
    %c0_8 = arith.constant 0 : index
    %12 = vector.load %arg4[%c0_7, %c0_8] : memref<128x128xbf16, #tpu.memory_space<vmem>>, vector<128x128xbf16>
    %cst_9 = arith.constant dense<0.000000e+00> : vector<128x128xf32>
    %13 = tpu.matmul %11, %12, %cst_9 {dimension_numbers = #tpu.dot_dimension_numbers<[1], [0], [0], [1], [0, 0, 1, 1], [], []>} : vector<128x128xbf16>, vector<128x128xbf16>, vector<128x128xf32> -> vector<128x128xf32>
    %c0_10 = arith.constant 0 : index
    %c0_11 = arith.constant 0 : index
    %14 = vector.load %arg5[%c0_10, %c0_11] : memref<1x128xf32, #tpu.memory_space<vmem>>, vector<1x128xf32>
    %15 = vector.broadcast %14 : vector<1x128xf32> to vector<128x128xf32>
    %16 = arith.addf %13, %15 : vector<128x128xf32>
    %cst_12 = arith.constant 0.000000e+00 : f32
    %17 = vector.broadcast %cst_12 : f32 to vector<128x128xf32>
    %18 = arith.cmpf ogt, %16, %17 : vector<128x128xf32>
    %cst_13 = arith.constant 0.00999999977 : f32
    %19 = vector.broadcast %cst_13 : f32 to vector<128x128xf32>
    %20 = arith.mulf %19, %16 : vector<128x128xf32>
    %21 = arith.select %18, %16, %20 : vector<128x128xi1>, vector<128x128xf32>
    %22 = arith.truncf %21 : vector<128x128xf32> to vector<128x128xbf16>
    %c0_14 = arith.constant 0 : index
    %c0_15 = arith.constant 0 : index
    %23 = vector.load %arg6[%c0_14, %c0_15] : memref<128x128xbf16, #tpu.memory_space<vmem>>, vector<128x128xbf16>
    %cst_16 = arith.constant dense<0.000000e+00> : vector<128x128xf32>
    %24 = tpu.matmul %22, %23, %cst_16 {dimension_numbers = #tpu.dot_dimension_numbers<[1], [0], [0], [1], [0, 0, 1, 1], [], []>} : vector<128x128xbf16>, vector<128x128xbf16>, vector<128x128xf32> -> vector<128x128xf32>
    %c0_17 = arith.constant 0 : index
    %c0_18 = arith.constant 0 : index
    %25 = vector.load %arg7[%c0_17, %c0_18] : memref<1x128xf32, #tpu.memory_space<vmem>>, vector<1x128xf32>
    %26 = vector.broadcast %25 : vector<1x128xf32> to vector<128x128xf32>
    %27 = arith.addf %24, %26 : vector<128x128xf32>
    %28 = vector.extract_strided_slice %27 {offsets = [0, 0], sizes = [128, 8], strides = [1, 1]} : vector<128x128xf32> to vector<128x8xf32>
    %c0_19 = arith.constant 0 : index
    %c0_20 = arith.constant 0 : index
    %29 = vector.load %arg8[%c0_19, %c0_20] : memref<128x8xf32, #tpu.memory_space<vmem>>, vector<128x8xf32>
    tpu.vector_store %arg8[%c0_19, %c0_20], %28 {strides = array<i32>} : memref<128x8xf32, #tpu.memory_space<vmem>>, vector<128x8xf32>,
    return
  }
  func.func @transform_0(%arg0: i32) -> (i32, i32) {
    %c0_i32 = arith.constant 0 : i32
    %c0_i32_0 = arith.constant 0 : i32
    return %arg0, %c0_i32 : i32, i32
  }
  func.func @transform_1(%arg0: i32) -> (i32, i32) {
    %c0_i32 = arith.constant 0 : i32
    %c0_i32_0 = arith.constant 0 : i32
    %c0_i32_1 = arith.constant 0 : i32
    return %c0_i32, %c0_i32_0 : i32, i32
  }
  func.func @transform_2(%arg0: i32) -> (i32, i32) {
    %c0_i32 = arith.constant 0 : i32
    %c0_i32_0 = arith.constant 0 : i32
    %c0_i32_1 = arith.constant 0 : i32
    return %c0_i32, %c0_i32_0 : i32, i32
  }
  func.func @transform_3(%arg0: i32) -> (i32, i32) {
    %c0_i32 = arith.constant 0 : i32
    %c0_i32_0 = arith.constant 0 : i32
    %c0_i32_1 = arith.constant 0 : i32
    return %c0_i32, %c0_i32_0 : i32, i32
  }
  func.func @transform_4(%arg0: i32) -> (i32, i32) {
    %c0_i32 = arith.constant 0 : i32
    %c0_i32_0 = arith.constant 0 : i32
    %c0_i32_1 = arith.constant 0 : i32
    return %c0_i32, %c0_i32_0 : i32, i32
  }
  func.func @transform_5(%arg0: i32) -> (i32, i32) {
    %c0_i32 = arith.constant 0 : i32
    %c0_i32_0 = arith.constant 0 : i32
    %c0_i32_1 = arith.constant 0 : i32
    return %c0_i32, %c0_i32_0 : i32, i32
  }
  func.func @transform_6(%arg0: i32) -> (i32, i32) {
    %c0_i32 = arith.constant 0 : i32
    %c0_i32_0 = arith.constant 0 : i32
    %c0_i32_1 = arith.constant 0 : i32
    return %c0_i32, %c0_i32_0 : i32, i32
  }
  func.func @transform_7(%arg0: i32) -> (i32, i32) {
    %c0_i32 = arith.constant 0 : i32
    %c0_i32_0 = arith.constant 0 : i32
    return %arg0, %c0_i32 : i32, i32
  }
}

</mosaic_0001>

<llo_original>
// kernel: tpu_custom_call.1
$region0: #{tpu_custom_call.1}
  #allocation0 [shape = 'u32[]', space=smem, size = 0x4, offset = 0x4, fixed_abs, tag = 'smem constant byte address 0x4 - core index']
  #allocation1 [shape = 'u32[144,128]{1,0:T(1,128)}', space=vmem, size = 0x12000, scoped, tag = 'internal scratch']
  %s0 = inlined_call_operand.hbm [shape: bf16[256,128], index: 0, kind: input, shape index: {}]
  %s1 = inlined_call_operand.hbm [shape: bf16[128,128], index: 1, kind: input, shape index: {}]
  %s2 = inlined_call_operand.vmem [shape: f32[1,128], index: 2, kind: input, shape index: {}]
  %s3 = inlined_call_operand.hbm [shape: bf16[128,128], index: 3, kind: input, shape index: {}]
  %s4 = inlined_call_operand.vmem [shape: f32[1,128], index: 4, kind: input, shape index: {}]
  %s5 = inlined_call_operand.hbm [shape: bf16[128,128], index: 5, kind: input, shape index: {}]
  %s6 = inlined_call_operand.vmem [shape: f32[1,128], index: 6, kind: input, shape index: {}]
  %s7 = inlined_call_operand.vmem [shape: f32[256,8], index: 7, kind: output, shape index: {}]
  %s8 = sld [smem:[#allocation0]]
  $region77: #{tpu_custom_call.1} parent=0
    _
  %s10 = ssub.s32 1, %s8
  %s11 = scalar_select 0, %s10, %s8
  $region1: #{tpu_custom_call.1} parent=0
    #allocation2 [shape = 'u8[65536]{0}', space=vmem, size = 0x10000, scoped, tag = 'input window, operand 0']
    #allocation3 [shape = 's32[2]{0}', space=sflag, size = 0x8, scoped, tag = 'scoped memory for tpu_custom_call.1']
    #allocation4 [shape = 'u8[32768]{0}', space=vmem, size = 0x8000, scoped, tag = 'input window, operand 1, single buffered']
    #allocation5 [shape = 's32[1]{0}', space=sflag, size = 0x4, scoped, tag = 'scoped memory for tpu_custom_call.1']
    #allocation6 [shape = 'u8[32768]{0}', space=vmem, size = 0x8000, scoped, tag = 'input window, operand 3, single buffered']
    #allocation7 [shape = 'u8[32768]{0}', space=vmem, size = 0x8000, scoped, tag = 'input window, operand 5, single buffered']
    #allocation8 [shape = 's32[1]{0}', space=sflag, size = 0x4, scoped, tag = 'scoped memory for tpu_custom_call.1']
    %12 = vsyncpa [#allocation3], 0
    %s13 = scalar_lea.sflag [#allocation3], 1
    %14 = vsyncpa %s13, 0
    %15 = vsyncpa [#allocation5], 0
    %16 = vsyncpa [#allocation8], 0
    loop: start=0, step=1, limit=4
    $region2: #{tpu_custom_call.1} parent=1 // loop_pre_header
      _
    $region3: #{tpu_custom_call.1} parent=1 // loop_header
      %s18 = sphi 0, %s22
      %p19 = scmp.ge.s32.totalorder %s18, 4
      %s28 = sphi 0, %s30
      %s31 = sphi 0, %s28
      %s32 = sphi 0, %s31
      %s48 = sphi 0, %s32
      %s52 = sphi 0, %s52
      %s54 = sphi 0, %s52
      %s55 = sphi 0, %s54
      %s69 = sphi 0, %s55
      %s73 = sphi 0, %s73
      %s75 = sphi 0, %s73
      %s76 = sphi 0, %s75
      %s90 = sphi 0, %s76
      %s94 = sphi 0, %s94
      %s96 = sphi 0, %s94
      %s97 = sphi 0, %s96
      %s111 = sphi 0, %s97
      %s115 = sphi 0, %s115
      %s117 = sphi 0, %s115
      %s118 = sphi 0, %s117
      %s132 = sphi 0, %s118
      %s136 = sphi 0, %s136
      %s138 = sphi 0, %s136
      %s139 = sphi 0, %s138
      %s153 = sphi 0, %s139
      %s157 = sphi 0, %s157
      %s159 = sphi 0, %s157
      %s160 = sphi 0, %s159
      %s174 = sphi 0, %s160
      %s180 = sphi 0, %s182
      %s183 = sphi 0, %s180
      %s184 = sphi 0, %s183
      %s200 = sphi 0, %s184
    $region4: #{tpu_custom_call.1} parent=1 // loop_header_branch
      %21 = sbr.rel (%p19) target = $region8
    $region5: #{tpu_custom_call.1} parent=1 // loop_body
      %s23 = ssub.s32 %s18, 1
      %s24 = ssub.s32 %s18, 2
      %s25 = sadd.s32 %s18, 1
      %s26 = ssub.s32 %s18, %s25
      %p27 = scmp.eq.s32.totalorder %s26, 0
      %s29 = sadd.s32 %s28, 1
      %s30 = scalar_select %p27, %s28, %s29
      %p33 = pneg %p27
      %p34 = scmp.eq.s32.totalorder %s18, 1
      %p35 = por %p33, %p34
      %p36 = scmp.ne.s32.totalorder %s28, %s31
      %p37 = scmp.eq.s32.totalorder %s18, 0
      %p38 = por %p36, %p37
      %p39 = scmp.ne.s32.totalorder %s28, %s31
      %p40 = scmp.eq.s32.totalorder %s23, 1
      %p41 = por %p39, %p40
      %p42 = scmp.ne.s32.totalorder %s31, %s32
      %p43 = scmp.eq.s32.totalorder %s23, 0
      %p44 = por %p42, %p43
      %p45 = scmp.ne.s32.totalorder %s31, %s32
      %p46 = scmp.eq.s32.totalorder %s24, 1
      %p47 = por %p45, %p46
      %p49 = scmp.ne.s32.totalorder %s32, %s48
      %p50 = scmp.eq.s32.totalorder %s24, 0
      %p51 = por %p49, %p50
      %s53 = sadd.s32 %s52, 1
      %p56 = scmp.eq.s32.totalorder %s18, 1
      %p57 = scmp.ne.s32.totalorder %s52, %s54
      %p58 = scmp.eq.s32.totalorder %s18, 0
      %p59 = por %p57, %p58
      %p60 = scmp.ne.s32.totalorder %s52, %s54
      %p61 = scmp.eq.s32.totalorder %s23, 1
      %p62 = por %p60, %p61
      %p63 = scmp.ne.s32.totalorder %s54, %s55
      %p64 = scmp.eq.s32.totalorder %s23, 0
      %p65 = por %p63, %p64
      %p66 = scmp.ne.s32.totalorder %s54, %s55
      %p67 = scmp.eq.s32.totalorder %s24, 1
      %p68 = por %p66, %p67
      %p70 = scmp.ne.s32.totalorder %s55, %s69
      %p71 = scmp.eq.s32.totalorder %s24, 0
      %p72 = por %p70, %p71
      %s74 = sadd.s32 %s73, 1
      %p77 = scmp.eq.s32.totalorder %s18, 1
      %p78 = scmp.ne.s32.totalorder %s73, %s75
      %p79 = scmp.eq.s32.totalorder %s18, 0
      %p80 = por %p78, %p79
      %p81 = scmp.ne.s32.totalorder %s73, %s75
      %p82 = scmp.eq.s32.totalorder %s23, 1
      %p83 = por %p81, %p82
      %p84 = scmp.ne.s32.totalorder %s75, %s76
      %p85 = scmp.eq.s32.totalorder %s23, 0
      %p86 = por %p84, %p85
      %p87 = scmp.ne.s32.totalorder %s75, %s76
      %p88 = scmp.eq.s32.totalorder %s24, 1
      %p89 = por %p87, %p88
      %p91 = scmp.ne.s32.totalorder %s76, %s90
      %p92 = scmp.eq.s32.totalorder %s24, 0
      %p93 = por %p91, %p92
      %s95 = sadd.s32 %s94, 1
      %p98 = scmp.eq.s32.totalorder %s18, 1
      %p99 = scmp.ne.s32.totalorder %s94, %s96
      %p100 = scmp.eq.s32.totalorder %s18, 0
      %p101 = por %p99, %p100
      %p102 = scmp.ne.s32.totalorder %s94, %s96
      %p103 = scmp.eq.s32.totalorder %s23, 1
      %p104 = por %p102, %p103
      %p105 = scmp.ne.s32.totalorder %s96, %s97
      %p106 = scmp.eq.s32.totalorder %s23, 0
      %p107 = por %p105, %p106
      %p108 = scmp.ne.s32.totalorder %s96, %s97
      %p109 = scmp.eq.s32.totalorder %s24, 1
      %p110 = por %p108, %p109
      %p112 = scmp.ne.s32.totalorder %s97, %s111
      %p113 = scmp.eq.s32.totalorder %s24, 0
      %p114 = por %p112, %p113
      %s116 = sadd.s32 %s115, 1
      %p119 = scmp.eq.s32.totalorder %s18, 1
      %p120 = scmp.ne.s32.totalorder %s115, %s117
      %p121 = scmp.eq.s32.totalorder %s18, 0
      %p122 = por %p120, %p121
      %p123 = scmp.ne.s32.totalorder %s115, %s117
      %p124 = scmp.eq.s32.totalorder %s23, 1
      %p125 = por %p123, %p124
      %p126 = scmp.ne.s32.totalorder %s117, %s118
      %p127 = scmp.eq.s32.totalorder %s23, 0
      %p128 = por %p126, %p127
      %p129 = scmp.ne.s32.totalorder %s117, %s118
      %p130 = scmp.eq.s32.totalorder %s24, 1
      %p131 = por %p129, %p130
      %p133 = scmp.ne.s32.totalorder %s118, %s132
      %p134 = scmp.eq.s32.totalorder %s24, 0
      %p135 = por %p133, %p134
      %s137 = sadd.s32 %s136, 1
      %p140 = scmp.eq.s32.totalorder %s18, 1
      %p141 = scmp.ne.s32.totalorder %s136, %s138
      %p142 = scmp.eq.s32.totalorder %s18, 0
      %p143 = por %p141, %p142
      %p144 = scmp.ne.s32.totalorder %s136, %s138
      %p145 = scmp.eq.s32.totalorder %s23, 1
      %p146 = por %p144, %p145
      %p147 = scmp.ne.s32.totalorder %s138, %s139
      %p148 = scmp.eq.s32.totalorder %s23, 0
      %p149 = por %p147, %p148
      %p150 = scmp.ne.s32.totalorder %s138, %s139
      %p151 = scmp.eq.s32.totalorder %s24, 1
      %p152 = por %p150, %p151
      %p154 = scmp.ne.s32.totalorder %s139, %s153
      %p155 = scmp.eq.s32.totalorder %s24, 0
      %p156 = por %p154, %p155
      %s158 = sadd.s32 %s157, 1
      %p161 = scmp.eq.s32.totalorder %s18, 1
      %p162 = scmp.ne.s32.totalorder %s157, %s159
      %p163 = scmp.eq.s32.totalorder %s18, 0
      %p164 = por %p162, %p163
      %p165 = scmp.ne.s32.totalorder %s157, %s159
      %p166 = scmp.eq.s32.totalorder %s23, 1
      %p167 = por %p165, %p166
      %p168 = scmp.ne.s32.totalorder %s159, %s160
      %p169 = scmp.eq.s32.totalorder %s23, 0
      %p170 = por %p168, %p169
      %p171 = scmp.ne.s32.totalorder %s159, %s160
      %p172 = scmp.eq.s32.totalorder %s24, 1
      %p173 = por %p171, %p172
      %p175 = scmp.ne.s32.totalorder %s160, %s174
      %p176 = scmp.eq.s32.totalorder %s24, 0
      %p177 = por %p175, %p176
      %s178 = ssub.s32 %s18, %s25
      %p179 = scmp.eq.s32.totalorder %s178, 0
      %s181 = sadd.s32 %s180, 1
      %s182 = scalar_select %p179, %s180, %s181
      %p185 = pneg %p179
      %p186 = scmp.eq.s32.totalorder %s18, 1
      %p187 = por %p185, %p186
      %p188 = scmp.ne.s32.totalorder %s180, %s183
      %p189 = scmp.eq.s32.totalorder %s18, 0
      %p190 = por %p188, %p189
      %p191 = scmp.ne.s32.totalorder %s180, %s183
      %p192 = scmp.eq.s32.totalorder %s23, 1
      %p193 = por %p191, %p192
      %p194 = scmp.ne.s32.totalorder %s183, %s184
      %p195 = scmp.eq.s32.totalorder %s23, 0
      %p196 = por %p194, %p195
      %p197 = scmp.ne.s32.totalorder %s183, %s184
      %p198 = scmp.eq.s32.totalorder %s24, 1
      %p199 = por %p197, %p198
      %p201 = scmp.ne.s32.totalorder %s184, %s200
      %p202 = scmp.eq.s32.totalorder %s24, 0
      %p203 = por %p201, %p202
      %p204 = scmp.le.s32.totalorder 1, %s18
      %p205 = scmp.lt.s32.totalorder %s18, 3
      %p206 = pnand %p204, %p205
      %p207 = pneg %p206
      // Predicated region
      $region9: #{tpu_custom_call.1} parent=5 // pred_check
        _
      $region10: #{tpu_custom_call.1} parent=5 // pred_check_branch
        %209 = sbr.rel (%p206) target = $region12
      $region11: #{tpu_custom_call.1} parent=5 // pred_region
        %s210 = ssub.s32 %s18, 1
        // Predicated region
        $region13: #{tpu_custom_call.1} parent=11 // pred_check
          %p211 = pneg %p65
        $region14: #{tpu_custom_call.1} parent=11 // pred_check_branch
          %213 = sbr.rel (%p211) target = $region16
        $region15: #{tpu_custom_call.1} parent=11 // pred_region
          %s215 = ssub.s32 1024, 1024
          %216 = vsyncadd [#allocation5], %s215
          %s217 = sshll.u32 [#allocation4], 4
          %s218 = int_to_ptr.vmem [resolvable:$true] %s217
          %223 = dma.hbm_to_vmem [thread:$0]  %s1, 1024, %s218, [#allocation5], 64, 64, 4
        $region16: #{tpu_custom_call.1} parent=11 // pred_fallthru
          _
        // Predicated region
        $region17: #{tpu_custom_call.1} parent=11 // pred_check
          %p224 = pneg %p86
        $region18: #{tpu_custom_call.1} parent=11 // pred_check_branch
          %226 = sbr.rel (%p224) target = $region20
        $region19: #{tpu_custom_call.1} parent=11 // pred_region
          _
        $region20: #{tpu_custom_call.1} parent=11 // pred_fallthru
          _
        // Predicated region
        $region21: #{tpu_custom_call.1} parent=11 // pred_check
          %p227 = pneg %p107
        $region22: #{tpu_custom_call.1} parent=11 // pred_check_branch
          %229 = sbr.rel (%p227) target = $region24
        $region23: #{tpu_custom_call.1} parent=11 // pred_region
          %s231 = ssub.s32 1024, 1024
          %232 = vsyncadd [#allocation5], %s231
          %s233 = sshll.u32 [#allocation6], 4
          %s234 = int_to_ptr.vmem [resolvable:$true] %s233
          %239 = dma.hbm_to_vmem [thread:$0]  %s3, 1024, %s234, [#allocation5], 64, 64, 4
        $region24: #{tpu_custom_call.1} parent=11 // pred_fallthru
          _
        // Predicated region
        $region25: #{tpu_custom_call.1} parent=11 // pred_check
          %p240 = pneg %p128
        $region26: #{tpu_custom_call.1} parent=11 // pred_check_branch
          %242 = sbr.rel (%p240) target = $region28
        $region27: #{tpu_custom_call.1} parent=11 // pred_region
          _
        $region28: #{tpu_custom_call.1} parent=11 // pred_fallthru
          _
        // Predicated region
        $region29: #{tpu_custom_call.1} parent=11 // pred_check
          %p243 = pneg %p149
        $region30: #{tpu_custom_call.1} parent=11 // pred_check_branch
          %245 = sbr.rel (%p243) target = $region32
        $region31: #{tpu_custom_call.1} parent=11 // pred_region
          %s247 = ssub.s32 1024, 1024
          %248 = vsyncadd [#allocation8], %s247
          %s249 = sshll.u32 [#allocation7], 4
          %s250 = int_to_ptr.vmem [resolvable:$true] %s249
          %255 = dma.hbm_to_vmem [thread:$0]  %s5, 1024, %s250, [#allocation8], 64, 64, 4
        $region32: #{tpu_custom_call.1} parent=11 // pred_fallthru
          _
        // Predicated region
        $region33: #{tpu_custom_call.1} parent=11 // pred_check
          %p256 = pneg %p170
        $region34: #{tpu_custom_call.1} parent=11 // pred_check_branch
          %258 = sbr.rel (%p256) target = $region36
        $region35: #{tpu_custom_call.1} parent=11 // pred_region
          _
        $region36: #{tpu_custom_call.1} parent=11 // pred_fallthru
          _
      $region12: #{tpu_custom_call.1} parent=5 // pred_fallthru
        _
      %p259 = scmp.lt.s32.totalorder %s18, 2
      // Predicated region
      $region37: #{tpu_custom_call.1} parent=5 // pred_check
        %p260 = pneg %p259
      $region38: #{tpu_custom_call.1} parent=5 // pred_check_branch
        %262 = sbr.rel (%p260) target = $region40
      $region39: #{tpu_custom_call.1} parent=5 // pred_region
        // Predicated region
        $region41: #{tpu_custom_call.1} parent=39 // pred_check
          %p263 = pneg %p38
        $region42: #{tpu_custom_call.1} parent=39 // pred_check_branch
          %265 = sbr.rel (%p263) target = $region44
        $region43: #{tpu_custom_call.1} parent=39 // pred_region
          %s266 = sand.u32 %s28, 1
          %s267 = scalar_lea.sflag [#allocation3], %s266
          %s268 = sand.u32 %s28, 1
          %s269 = smul.addr %s268, 64
          %s270 = scalar_lea.vmem [#allocation2], %s269
          %s271 = smul.u32 16, %s18
          %s273 = ssub.s32 1024, 1024
          %274 = vsyncadd %s267, %s273
          %s275 = smul.addr %s271, 64
          %s276 = scalar_lea.hbm %s0, %s275
          %s277 = sshll.u32 %s270, 4
          %s278 = int_to_ptr.vmem [resolvable:$true] %s277
          %283 = dma.hbm_to_vmem [thread:$0]  %s276, 1024, %s278, %s267, 64, 64, 4
        $region44: #{tpu_custom_call.1} parent=39 // pred_fallthru
          _
      $region40: #{tpu_custom_call.1} parent=5 // pred_fallthru
        _
      %p284 = scmp.le.s32.totalorder 1, %s18
      %p285 = scmp.lt.s32.totalorder %s18, 3
      %p286 = pnand %p284, %p285
      %p287 = pneg %p286
      // Predicated region
      $region45: #{tpu_custom_call.1} parent=5 // pred_check
        _
      $region46: #{tpu_custom_call.1} parent=5 // pred_check_branch
        %289 = sbr.rel (%p286) target = $region48
      $region47: #{tpu_custom_call.1} parent=5 // pred_region
        %s290 = ssub.s32 %s18, 1
        %s291 = sand.u32 %s31, 1
        %s292 = scalar_lea.sflag [#allocation3], %s291
        %s293 = sand.u32 %s31, 1
        %s294 = smul.addr %s293, 64
        %s295 = scalar_lea.vmem [#allocation2], %s294
        // Predicated region
        $region49: #{tpu_custom_call.1} parent=47 // pred_check
          %p296 = pneg %p44
        $region50: #{tpu_custom_call.1} parent=47 // pred_check_branch
          %298 = sbr.rel (%p296) target = $region52
        $region51: #{tpu_custom_call.1} parent=47 // pred_region
          %299 = dma.done %s292, 1024
        $region52: #{tpu_custom_call.1} parent=47 // pred_fallthru
          _
        // Predicated region
        $region53: #{tpu_custom_call.1} parent=47 // pred_check
          %p300 = pneg %p65
        $region54: #{tpu_custom_call.1} parent=47 // pred_check_branch
          %302 = sbr.rel (%p300) target = $region56
        $region55: #{tpu_custom_call.1} parent=47 // pred_region
          %303 = dma.done [#allocation5], 1024
        $region56: #{tpu_custom_call.1} parent=47 // pred_fallthru
          _
        // Predicated region
        $region57: #{tpu_custom_call.1} parent=47 // pred_check
          %p304 = pneg %p107
        $region58: #{tpu_custom_call.1} parent=47 // pred_check_branch
          %306 = sbr.rel (%p304) target = $region60
        $region59: #{tpu_custom_call.1} parent=47 // pred_region
          %307 = dma.done [#allocation5], 1024
        $region60: #{tpu_custom_call.1} parent=47 // pred_fallthru
          _
        // Predicated region
        $region61: #{tpu_custom_call.1} parent=47 // pred_check
          %p308 = pneg %p149
        $region62: #{tpu_custom_call.1} parent=47 // pred_check_branch
          %310 = sbr.rel (%p308) target = $region64
        $region63: #{tpu_custom_call.1} parent=47 // pred_region
          %311 = dma.done [#allocation8], 1024
        $region64: #{tpu_custom_call.1} parent=47 // pred_fallthru
          _
        %s312 = sand.u32 %s31, 1
        %s313 = scalar_lea.sflag [#allocation3], %s312
        %s314 = sand.u32 %s31, 1
        %s315 = smul.addr %s314, 64
        %s316 = scalar_lea.vmem [#allocation2], %s315
        %p317 = pneg %p44
        %p318 = pneg %p41
        %p319 = pneg %p65
        %p320 = pneg %p62
        %p321 = pneg %p86
        %p322 = pneg %p83
        %p323 = pneg %p107
        %p324 = pneg %p104
        %p325 = pneg %p128
        %p326 = pneg %p125
        %p327 = pneg %p149
        %p328 = pneg %p146
        %p329 = pneg %p170
        %p330 = pneg %p167
        %p331 = pneg %p196
        %p332 = pneg %p193
        %s333 = smul.u32 16, %s23
        %p334 = scmp.lt.s32.totalorder %s333, 31
        %s335 = scalar_select %p334, %s333, 31
        %s336 = smul.addr %s335, 8
        %s337 = scalar_lea.vmem %s7, %s336
        %s338 = smul.u32 16, %s23
        %s339 = smul.u32 16, %s23
        %p340 = scmp.lt.s32.totalorder %s339, 31
        %s341 = scalar_select %p340, %s339, 31
        %s342 = smul.addr %s341, 8
        %s343 = scalar_lea.vmem %s7, %s342
        %s344 = smul.u32 16, %s23
        %v346 = vld [vmem:[%s295] sm:$0xf]
        %v347 = vld [vmem:[%s295 + $0x4] sm:$0xf]
        %v348 = vld [vmem:[%s295 + $0x8] sm:$0xf]
        %v349 = vld [vmem:[%s295 + $0xc] sm:$0xf]
        %v350 = vld [vmem:[%s295 + $0x10] sm:$0xf]
        %v351 = vld [vmem:[%s295 + $0x14] sm:$0xf]
        %v352 = vld [vmem:[%s295 + $0x18] sm:$0xf]
        %v353 = vld [vmem:[%s295 + $0x1c] sm:$0xf]
        %v354 = vld [vmem:[%s295 + $0x20] sm:$0xf]
        %v355 = vld [vmem:[%s295 + $0x24] sm:$0xf]
        %v356 = vld [vmem:[%s295 + $0x28] sm:$0xf]
        %v357 = vld [vmem:[%s295 + $0x2c] sm:$0xf]
        %v358 = vld [vmem:[%s295 + $0x30] sm:$0xf]
        %v359 = vld [vmem:[%s295 + $0x34] sm:$0xf]
        %v360 = vld [vmem:[%s295 + $0x38] sm:$0xf]
        %v361 = vld [vmem:[%s295 + $0x3c] sm:$0xf]
        %v362 = vld [vmem:[#allocation4] sm:$0xf]
        %v363 = vld [vmem:[#allocation4 + $0x4] sm:$0xf]
        %v364 = vld [vmem:[#allocation4 + $0x8] sm:$0xf]
        %v365 = vld [vmem:[#allocation4 + $0xc] sm:$0xf]
        %v366 = vld [vmem:[#allocation4 + $0x10] sm:$0xf]
        %v367 = vld [vmem:[#allocation4 + $0x14] sm:$0xf]
        %v368 = vld [vmem:[#allocation4 + $0x18] sm:$0xf]
        %v369 = vld [vmem:[#allocation4 + $0x1c] sm:$0xf]
        %v370 = vld [vmem:[#allocation4 + $0x20] sm:$0xf]
        %v371 = vld [vmem:[#allocation4 + $0x24] sm:$0xf]
        %v372 = vld [vmem:[#allocation4 + $0x28] sm:$0xf]
        %v373 = vld [vmem:[#allocation4 + $0x2c] sm:$0xf]
        %v374 = vld [vmem:[#allocation4 + $0x30] sm:$0xf]
        %v375 = vld [vmem:[#allocation4 + $0x34] sm:$0xf]
        %v376 = vld [vmem:[#allocation4 + $0x38] sm:$0xf]
        %v377 = vld [vmem:[#allocation4 + $0x3c] sm:$0xf]
        %v378 = vld [vmem:[%s2] sm:$0x1]
        %v380 = vlaneseq
        %v381 = vshrl.u32 %v380, 7
        %v382 = vsub.s32 0, %v381
        %v383 = vrot.slane %v378, %v382
        %v401 = vunpack.c.l.b16 %v346
        %v402 = vunpack.c.l.b16 %v347
        %v403 = vunpack.c.l.b16 %v348
        %v404 = vunpack.c.l.b16 %v349
        %v405 = vunpack.c.l.b16 %v350
        %v406 = vunpack.c.l.b16 %v351
        %v407 = vunpack.c.l.b16 %v352
        %v408 = vunpack.c.l.b16 %v353
        %v409 = vunpack.c.l.b16 %v354
        %v410 = vunpack.c.l.b16 %v355
        %v411 = vunpack.c.l.b16 %v356
        %v412 = vunpack.c.l.b16 %v357
        %v413 = vunpack.c.l.b16 %v358
        %v414 = vunpack.c.l.b16 %v359
        %v415 = vunpack.c.l.b16 %v360
        %v416 = vunpack.c.l.b16 %v361
        %v417 = vpack.c.b16 %v402, %v401
        %v418 = vpack.c.b16 %v404, %v403
        %v419 = vpack.c.b16 %v406, %v405
        %v420 = vpack.c.b16 %v408, %v407
        %v421 = vpack.c.b16 %v410, %v409
        %v422 = vpack.c.b16 %v412, %v411
        %v423 = vpack.c.b16 %v414, %v413
        %v424 = vpack.c.b16 %v416, %v415
        %v449 = vunpack.c.l.b16 %v362
        %v450 = vunpack.c.l.b16 %v363
        %v451 = vunpack.c.l.b16 %v364
        %v452 = vunpack.c.l.b16 %v365
        %v453 = vunpack.c.l.b16 %v366
        %v454 = vunpack.c.l.b16 %v367
        %v455 = vunpack.c.l.b16 %v368
        %v456 = vunpack.c.l.b16 %v369
        %v457 = vunpack.c.l.b16 %v370
        %v458 = vunpack.c.l.b16 %v371
        %v459 = vunpack.c.l.b16 %v372
        %v460 = vunpack.c.l.b16 %v373
        %v461 = vunpack.c.l.b16 %v374
        %v462 = vunpack.c.l.b16 %v375
        %v463 = vunpack.c.l.b16 %v376
        %v464 = vunpack.c.l.b16 %v377
        %v465 = vpack.c.b16 %v450, %v449
        %v466 = vpack.c.b16 %v452, %v451
        %v467 = vpack.c.b16 %v454, %v453
        %v468 = vpack.c.b16 %v456, %v455
        %v469 = vpack.c.b16 %v458, %v457
        %v470 = vpack.c.b16 %v460, %v459
        %v471 = vpack.c.b16 %v462, %v461
        %v472 = vpack.c.b16 %v464, %v463
        %481 = vmatprep.subr.bf16.mxu0 0
        %482 = vmatpush1.bf16.msra.mxu0 %v465
        %483 = vmatprep.subr.bf16.mxu0 0
        %484 = vmatpush1.bf16.msra.mxu0 %v466
        %485 = vmatprep.subr.bf16.mxu0 0
        %486 = vmatpush1.bf16.msra.mxu0 %v467
        %487 = vmatprep.subr.bf16.mxu0 0
        %488 = vmatpush1.bf16.msra.mxu0 %v468
        %489 = vmatprep.subr.bf16.mxu0 0
        %490 = vmatpush1.bf16.msra.mxu0 %v469
        %491 = vmatprep.subr.bf16.mxu0 0
        %492 = vmatpush1.bf16.msra.mxu0 %v470
        %493 = vmatprep.subr.bf16.mxu0 0
        %494 = vmatpush1.bf16.msra.mxu0 %v471
        %495 = vmatprep.subr.bf16.mxu0 0
        %496 = vmatpush1.bf16.msra.mxu0 %v472
        %497 = vmatprep.subr.bf16.mxu0 0
        %498 = vmatpush1.bf16.msra.mxu0 0
        %499 = vmatprep.subr.bf16.mxu0 0
        %500 = vmatpush1.bf16.msra.mxu0 0
        %501 = vmatprep.subr.bf16.mxu0 0
        %502 = vmatpush1.bf16.msra.mxu0 0
        %503 = vmatprep.subr.bf16.mxu0 0
        %504 = vmatpush1.bf16.msra.mxu0 0
        %505 = vmatprep.subr.bf16.mxu0 0
        %506 = vmatpush1.bf16.msra.mxu0 0
        %507 = vmatprep.subr.bf16.mxu0 0
        %508 = vmatpush1.bf16.msra.mxu0 0
        %509 = vmatprep.subr.bf16.mxu0 0
        %510 = vmatpush1.bf16.msra.mxu0 0
        %511 = vmatprep.subr.bf16.mxu0 0
        %512 = vmatpush1.bf16.msra.mxu0 0
        %513 = vmatprep.mubr.bf16.mxu0 0
        %514 = vmatmul.mubr.bf16.gmra.mrb[0].mxu0 %v417
        %v515 = vpop.f32.mrb[0].mxu0
        %v516 = vadd.f32 %v383, %v515
        %v517 = vpop.f32.mrb[0].mxu0
        %v518 = vpop.f32.mrb[0].mxu0
        %v519 = vadd.f32 %v383, %v518
        %v520 = vpop.f32.mrb[0].mxu0
        %521 = vmatprep.mubr.bf16.mxu0 0
        %522 = vmatmul.mubr.bf16.gmra.mrb[0].mxu0 %v418
        %v523 = vpop.f32.mrb[0].mxu0
        %v524 = vadd.f32 %v383, %v523
        %v525 = vpop.f32.mrb[0].mxu0
        %v526 = vpop.f32.mrb[0].mxu0
        %v527 = vadd.f32 %v383, %v526
        %v528 = vpop.f32.mrb[0].mxu0
        %529 = vmatprep.mubr.bf16.mxu0 0
        %530 = vmatmul.mubr.bf16.gmra.mrb[0].mxu0 %v419
        %v531 = vpop.f32.mrb[0].mxu0
        %v532 = vadd.f32 %v383, %v531
        %v533 = vpop.f32.mrb[0].mxu0
        %v534 = vpop.f32.mrb[0].mxu0
        %v535 = vadd.f32 %v383, %v534
        %v536 = vpop.f32.mrb[0].mxu0
        %537 = vmatprep.mubr.bf16.mxu0 0
        %538 = vmatmul.mubr.bf16.gmra.mrb[0].mxu0 %v420
        %v539 = vpop.f32.mrb[0].mxu0
        %v540 = vadd.f32 %v383, %v539
        %v541 = vpop.f32.mrb[0].mxu0
        %v542 = vpop.f32.mrb[0].mxu0
        %v543 = vadd.f32 %v383, %v542
        %v544 = vpop.f32.mrb[0].mxu0
        %545 = vmatprep.mubr.bf16.mxu0 0
        %546 = vmatmul.mubr.bf16.gmra.mrb[0].mxu0 %v421
        %v547 = vpop.f32.mrb[0].mxu0
        %v548 = vadd.f32 %v383, %v547
        %v549 = vpop.f32.mrb[0].mxu0
        %v550 = vpop.f32.mrb[0].mxu0
        %v551 = vadd.f32 %v383, %v550
        %v552 = vpop.f32.mrb[0].mxu0
        %553 = vmatprep.mubr.bf16.mxu0 0
        %554 = vmatmul.mubr.bf16.gmra.mrb[0].mxu0 %v422
        %v555 = vpop.f32.mrb[0].mxu0
        %v556 = vadd.f32 %v383, %v555
        %v557 = vpop.f32.mrb[0].mxu0
        %v558 = vpop.f32.mrb[0].mxu0
        %v559 = vadd.f32 %v383, %v558
        %v560 = vpop.f32.mrb[0].mxu0
        %561 = vmatprep.mubr.bf16.mxu0 0
        %562 = vmatmul.mubr.bf16.gmra.mrb[0].mxu0 %v423
        %v563 = vpop.f32.mrb[0].mxu0
        %v564 = vadd.f32 %v383, %v563
        %v565 = vpop.f32.mrb[0].mxu0
        %v566 = vpop.f32.mrb[0].mxu0
        %v567 = vadd.f32 %v383, %v566
        %v568 = vpop.f32.mrb[0].mxu0
        %569 = vmatprep.mubr.bf16.mxu0 0
        %570 = vmatmul.mubr.bf16.gmra.mrb[0].mxu0 %v424
        %v571 = vpop.f32.mrb[0].mxu0
        %v572 = vadd.f32 %v383, %v571
        %v573 = vpop.f32.mrb[0].mxu0
        %v574 = vpop.f32.mrb[0].mxu0
        %v575 = vadd.f32 %v383, %v574
        %v576 = vpop.f32.mrb[0].mxu0
        %577 = vdwg.mxu0
        %vm578 = vcmp.gt.f32.partialorder %v516, 0.0
        %vm579 = vcmp.gt.f32.partialorder %v519, 0.0
        %vm580 = vcmp.gt.f32.partialorder %v524, 0.0
        %vm581 = vcmp.gt.f32.partialorder %v527, 0.0
        %vm582 = vcmp.gt.f32.partialorder %v532, 0.0
        %vm583 = vcmp.gt.f32.partialorder %v535, 0.0
        %vm584 = vcmp.gt.f32.partialorder %v540, 0.0
        %vm585 = vcmp.gt.f32.partialorder %v543, 0.0
        %vm586 = vcmp.gt.f32.partialorder %v548, 0.0
        %vm587 = vcmp.gt.f32.partialorder %v551, 0.0
        %vm588 = vcmp.gt.f32.partialorder %v556, 0.0
        %vm589 = vcmp.gt.f32.partialorder %v559, 0.0
        %vm590 = vcmp.gt.f32.partialorder %v564, 0.0
        %vm591 = vcmp.gt.f32.partialorder %v567, 0.0
        %vm592 = vcmp.gt.f32.partialorder %v572, 0.0
        %vm593 = vcmp.gt.f32.partialorder %v575, 0.0
        %v594 = vmul.f32 %v516, 0.01
        %v595 = vmul.f32 %v519, 0.01
        %v596 = vmul.f32 %v524, 0.01
        %v597 = vmul.f32 %v527, 0.01
        %v598 = vmul.f32 %v532, 0.01
        %v599 = vmul.f32 %v535, 0.01
        %v600 = vmul.f32 %v540, 0.01
        %v601 = vmul.f32 %v543, 0.01
        %v602 = vmul.f32 %v548, 0.01
        %v603 = vmul.f32 %v551, 0.01
        %v604 = vmul.f32 %v556, 0.01
        %v605 = vmul.f32 %v559, 0.01
        %v606 = vmul.f32 %v564, 0.01
        %v607 = vmul.f32 %v567, 0.01
        %v608 = vmul.f32 %v572, 0.01
        %v609 = vmul.f32 %v575, 0.01
        %v610 = vsel %vm578, %v516, %v594
        %v611 = vsel %vm579, %v519, %v595
        %v612 = vsel %vm580, %v524, %v596
        %v613 = vsel %vm581, %v527, %v597
        %v614 = vsel %vm582, %v532, %v598
        %v615 = vsel %vm583, %v535, %v599
        %v616 = vsel %vm584, %v540, %v600
        %v617 = vsel %vm585, %v543, %v601
        %v618 = vsel %vm586, %v548, %v602
        %v619 = vsel %vm587, %v551, %v603
        %v620 = vsel %vm588, %v556, %v604
        %v621 = vsel %vm589, %v559, %v605
        %v622 = vsel %vm590, %v564, %v606
        %v623 = vsel %vm591, %v567, %v607
        %v624 = vsel %vm592, %v572, %v608
        %v625 = vsel %vm593, %v575, %v609
        %v626 = vpack.c.bf16 %v611, %v610
        %v627 = vpack.c.bf16 %v613, %v612
        %v628 = vpack.c.bf16 %v615, %v614
        %v629 = vpack.c.bf16 %v617, %v616
        %v630 = vpack.c.bf16 %v619, %v618
        %v631 = vpack.c.bf16 %v621, %v620
        %v632 = vpack.c.bf16 %v623, %v622
        %v633 = vpack.c.bf16 %v625, %v624
        %v634 = vld [vmem:[#allocation6] sm:$0xf]
        %v635 = vld [vmem:[#allocation6 + $0x4] sm:$0xf]
        %v636 = vld [vmem:[#allocation6 + $0x8] sm:$0xf]
        %v637 = vld [vmem:[#allocation6 + $0xc] sm:$0xf]
        %v638 = vld [vmem:[#allocation6 + $0x10] sm:$0xf]
        %v639 = vld [vmem:[#allocation6 + $0x14] sm:$0xf]
        %v640 = vld [vmem:[#allocation6 + $0x18] sm:$0xf]
        %v641 = vld [vmem:[#allocation6 + $0x1c] sm:$0xf]
        %v642 = vld [vmem:[#allocation6 + $0x20] sm:$0xf]
        %v643 = vld [vmem:[#allocation6 + $0x24] sm:$0xf]
        %v644 = vld [vmem:[#allocation6 + $0x28] sm:$0xf]
        %v645 = vld [vmem:[#allocation6 + $0x2c] sm:$0xf]
        %v646 = vld [vmem:[#allocation6 + $0x30] sm:$0xf]
        %v647 = vld [vmem:[#allocation6 + $0x34] sm:$0xf]
        %v648 = vld [vmem:[#allocation6 + $0x38] sm:$0xf]
        %v649 = vld [vmem:[#allocation6 + $0x3c] sm:$0xf]
        %v650 = vld [vmem:[%s4] sm:$0x1]
        %v652 = vlaneseq
        %v653 = vshrl.u32 %v652, 7
        %v654 = vsub.s32 0, %v653
        %v655 = vrot.slane %v650, %v654
        %v673 = vunpack.c.l.b16 %v634
        %v674 = vunpack.c.l.b16 %v635
        %v675 = vunpack.c.l.b16 %v636
        %v676 = vunpack.c.l.b16 %v637
        %v677 = vunpack.c.l.b16 %v638
        %v678 = vunpack.c.l.b16 %v639
        %v679 = vunpack.c.l.b16 %v640
        %v680 = vunpack.c.l.b16 %v641
        %v681 = vunpack.c.l.b16 %v642
        %v682 = vunpack.c.l.b16 %v643
        %v683 = vunpack.c.l.b16 %v644
        %v684 = vunpack.c.l.b16 %v645
        %v685 = vunpack.c.l.b16 %v646
        %v686 = vunpack.c.l.b16 %v647
        %v687 = vunpack.c.l.b16 %v648
        %v688 = vunpack.c.l.b16 %v649
        %v689 = vpack.c.b16 %v674, %v673
        %v690 = vpack.c.b16 %v676, %v675
        %v691 = vpack.c.b16 %v678, %v677
        %v692 = vpack.c.b16 %v680, %v679
        %v693 = vpack.c.b16 %v682, %v681
        %v694 = vpack.c.b16 %v684, %v683
        %v695 = vpack.c.b16 %v686, %v685
        %v696 = vpack.c.b16 %v688, %v687
        %705 = vmatprep.subr.bf16.mxu0 0
        %706 = vmatpush1.bf16.msra.mxu0 %v689
        %707 = vmatprep.subr.bf16.mxu0 0
        %708 = vmatpush1.bf16.msra.mxu0 %v690
        %709 = vmatprep.subr.bf16.mxu0 0
        %710 = vmatpush1.bf16.msra.mxu0 %v691
        %711 = vmatprep.subr.bf16.mxu0 0
        %712 = vmatpush1.bf16.msra.mxu0 %v692
        %713 = vmatprep.subr.bf16.mxu0 0
        %714 = vmatpush1.bf16.msra.mxu0 %v693
        %715 = vmatprep.subr.bf16.mxu0 0
        %716 = vmatpush1.bf16.msra.mxu0 %v694
        %717 = vmatprep.subr.bf16.mxu0 0
        %718 = vmatpush1.bf16.msra.mxu0 %v695
        %719 = vmatprep.subr.bf16.mxu0 0
        %720 = vmatpush1.bf16.msra.mxu0 %v696
        %721 = vmatprep.subr.bf16.mxu0 0
        %722 = vmatpush1.bf16.msra.mxu0 0
        %723 = vmatprep.subr.bf16.mxu0 0
        %724 = vmatpush1.bf16.msra.mxu0 0
        %725 = vmatprep.subr.bf16.mxu0 0
        %726 = vmatpush1.bf16.msra.mxu0 0
        %727 = vmatprep.subr.bf16.mxu0 0
        %728 = vmatpush1.bf16.msra.mxu0 0
        %729 = vmatprep.subr.bf16.mxu0 0
        %730 = vmatpush1.bf16.msra.mxu0 0
        %731 = vmatprep.subr.bf16.mxu0 0
        %732 = vmatpush1.bf16.msra.mxu0 0
        %733 = vmatprep.subr.bf16.mxu0 0
        %734 = vmatpush1.bf16.msra.mxu0 0
        %735 = vmatprep.subr.bf16.mxu0 0
        %736 = vmatpush1.bf16.msra.mxu0 0
        %737 = vmatprep.mubr.bf16.mxu0 0
        %738 = vmatmul.mubr.bf16.gmra.mrb[0].mxu0 %v626
        %v739 = vpop.f32.mrb[0].mxu0
        %v740 = vadd.f32 %v655, %v739
        %v741 = vpop.f32.mrb[0].mxu0
        %v742 = vpop.f32.mrb[0].mxu0
        %v743 = vadd.f32 %v655, %v742
        %v744 = vpop.f32.mrb[0].mxu0
        %745 = vmatprep.mubr.bf16.mxu0 0
        %746 = vmatmul.mubr.bf16.gmra.mrb[0].mxu0 %v627
        %v747 = vpop.f32.mrb[0].mxu0
        %v748 = vadd.f32 %v655, %v747
        %v749 = vpop.f32.mrb[0].mxu0
        %v750 = vpop.f32.mrb[0].mxu0
        %v751 = vadd.f32 %v655, %v750
        %v752 = vpop.f32.mrb[0].mxu0
        %753 = vmatprep.mubr.bf16.mxu0 0
        %754 = vmatmul.mubr.bf16.gmra.mrb[0].mxu0 %v628
        %v755 = vpop.f32.mrb[0].mxu0
        %v756 = vadd.f32 %v655, %v755
        %v757 = vpop.f32.mrb[0].mxu0
        %v758 = vpop.f32.mrb[0].mxu0
        %v759 = vadd.f32 %v655, %v758
        %v760 = vpop.f32.mrb[0].mxu0
        %761 = vmatprep.mubr.bf16.mxu0 0
        %762 = vmatmul.mubr.bf16.gmra.mrb[0].mxu0 %v629
        %v763 = vpop.f32.mrb[0].mxu0
        %v764 = vadd.f32 %v655, %v763
        %v765 = vpop.f32.mrb[0].mxu0
        %v766 = vpop.f32.mrb[0].mxu0
        %v767 = vadd.f32 %v655, %v766
        %v768 = vpop.f32.mrb[0].mxu0
        %769 = vmatprep.mubr.bf16.mxu0 0
        %770 = vmatmul.mubr.bf16.gmra.mrb[0].mxu0 %v630
        %v771 = vpop.f32.mrb[0].mxu0
        %v772 = vadd.f32 %v655, %v771
        %v773 = vpop.f32.mrb[0].mxu0
        %v774 = vpop.f32.mrb[0].mxu0
        %v775 = vadd.f32 %v655, %v774
        %v776 = vpop.f32.mrb[0].mxu0
        %777 = vmatprep.mubr.bf16.mxu0 0
        %778 = vmatmul.mubr.bf16.gmra.mrb[0].mxu0 %v631
        %v779 = vpop.f32.mrb[0].mxu0
        %v780 = vadd.f32 %v655, %v779
        %v781 = vpop.f32.mrb[0].mxu0
        %v782 = vpop.f32.mrb[0].mxu0
        %v783 = vadd.f32 %v655, %v782
        %v784 = vpop.f32.mrb[0].mxu0
        %785 = vmatprep.mubr.bf16.mxu0 0
        %786 = vmatmul.mubr.bf16.gmra.mrb[0].mxu0 %v632
        %v787 = vpop.f32.mrb[0].mxu0
        %v788 = vadd.f32 %v655, %v787
        %v789 = vpop.f32.mrb[0].mxu0
        %v790 = vpop.f32.mrb[0].mxu0
        %v791 = vadd.f32 %v655, %v790
        %v792 = vpop.f32.mrb[0].mxu0
        %793 = vmatprep.mubr.bf16.mxu0 0
        %794 = vmatmul.mubr.bf16.gmra.mrb[0].mxu0 %v633
        %v795 = vpop.f32.mrb[0].mxu0
        %v796 = vadd.f32 %v655, %v795
        %v797 = vpop.f32.mrb[0].mxu0
        %v798 = vpop.f32.mrb[0].mxu0
        %v799 = vadd.f32 %v655, %v798
        %v800 = vpop.f32.mrb[0].mxu0
        %801 = vdwg.mxu0
        %vm802 = vcmp.gt.f32.partialorder %v740, 0.0
        %vm803 = vcmp.gt.f32.partialorder %v743, 0.0
        %vm804 = vcmp.gt.f32.partialorder %v748, 0.0
        %vm805 = vcmp.gt.f32.partialorder %v751, 0.0
        %vm806 = vcmp.gt.f32.partialorder %v756, 0.0
        %vm807 = vcmp.gt.f32.partialorder %v759, 0.0
        %vm808 = vcmp.gt.f32.partialorder %v764, 0.0
        %vm809 = vcmp.gt.f32.partialorder %v767, 0.0
        %vm810 = vcmp.gt.f32.partialorder %v772, 0.0
        %vm811 = vcmp.gt.f32.partialorder %v775, 0.0
        %vm812 = vcmp.gt.f32.partialorder %v780, 0.0
        %vm813 = vcmp.gt.f32.partialorder %v783, 0.0
        %vm814 = vcmp.gt.f32.partialorder %v788, 0.0
        %vm815 = vcmp.gt.f32.partialorder %v791, 0.0
        %vm816 = vcmp.gt.f32.partialorder %v796, 0.0
        %vm817 = vcmp.gt.f32.partialorder %v799, 0.0
        %v818 = vmul.f32 %v740, 0.01
        %v819 = vmul.f32 %v743, 0.01
        %v820 = vmul.f32 %v748, 0.01
        %v821 = vmul.f32 %v751, 0.01
        %v822 = vmul.f32 %v756, 0.01
        %v823 = vmul.f32 %v759, 0.01
        %v824 = vmul.f32 %v764, 0.01
        %v825 = vmul.f32 %v767, 0.01
        %v826 = vmul.f32 %v772, 0.01
        %v827 = vmul.f32 %v775, 0.01
        %v828 = vmul.f32 %v780, 0.01
        %v829 = vmul.f32 %v783, 0.01
        %v830 = vmul.f32 %v788, 0.01
        %v831 = vmul.f32 %v791, 0.01
        %v832 = vmul.f32 %v796, 0.01
        %v833 = vmul.f32 %v799, 0.01
        %v834 = vsel %vm802, %v740, %v818
        %v835 = vsel %vm803, %v743, %v819
        %v836 = vsel %vm804, %v748, %v820
        %v837 = vsel %vm805, %v751, %v821
        %v838 = vsel %vm806, %v756, %v822
        %v839 = vsel %vm807, %v759, %v823
        %v840 = vsel %vm808, %v764, %v824
        %v841 = vsel %vm809, %v767, %v825
        %v842 = vsel %vm810, %v772, %v826
        %v843 = vsel %vm811, %v775, %v827
        %v844 = vsel %vm812, %v780, %v828
        %v845 = vsel %vm813, %v783, %v829
        %v846 = vsel %vm814, %v788, %v830
        %v847 = vsel %vm815, %v791, %v831
        %v848 = vsel %vm816, %v796, %v832
        %v849 = vsel %vm817, %v799, %v833
        %v850 = vpack.c.bf16 %v835, %v834
        %v851 = vpack.c.bf16 %v837, %v836
        %v852 = vpack.c.bf16 %v839, %v838
        %v853 = vpack.c.bf16 %v841, %v840
        %v854 = vpack.c.bf16 %v843, %v842
        %v855 = vpack.c.bf16 %v845, %v844
        %v856 = vpack.c.bf16 %v847, %v846
        %v857 = vpack.c.bf16 %v849, %v848
        %v858 = vld [vmem:[#allocation7] sm:$0xf]
        %v859 = vld [vmem:[#allocation7 + $0x4] sm:$0xf]
        %v860 = vld [vmem:[#allocation7 + $0x8] sm:$0xf]
        %v861 = vld [vmem:[#allocation7 + $0xc] sm:$0xf]
        %v862 = vld [vmem:[#allocation7 + $0x10] sm:$0xf]
        %v863 = vld [vmem:[#allocation7 + $0x14] sm:$0xf]
        %v864 = vld [vmem:[#allocation7 + $0x18] sm:$0xf]
        %v865 = vld [vmem:[#allocation7 + $0x1c] sm:$0xf]
        %v866 = vld [vmem:[#allocation7 + $0x20] sm:$0xf]
        %v867 = vld [vmem:[#allocation7 + $0x24] sm:$0xf]
        %v868 = vld [vmem:[#allocation7 + $0x28] sm:$0xf]
        %v869 = vld [vmem:[#allocation7 + $0x2c] sm:$0xf]
        %v870 = vld [vmem:[#allocation7 + $0x30] sm:$0xf]
        %v871 = vld [vmem:[#allocation7 + $0x34] sm:$0xf]
        %v872 = vld [vmem:[#allocation7 + $0x38] sm:$0xf]
        %v873 = vld [vmem:[#allocation7 + $0x3c] sm:$0xf]
        %v874 = vld [vmem:[%s6] sm:$0x1]
        %v876 = vlaneseq
        %v877 = vshrl.u32 %v876, 7
        %v878 = vsub.s32 0, %v877
        %v879 = vrot.slane %v874, %v878
        %v897 = vunpack.c.l.b16 %v858
        %v898 = vunpack.c.l.b16 %v859
        %v899 = vunpack.c.l.b16 %v860
        %v900 = vunpack.c.l.b16 %v861
        %v901 = vunpack.c.l.b16 %v862
        %v902 = vunpack.c.l.b16 %v863
        %v903 = vunpack.c.l.b16 %v864
        %v904 = vunpack.c.l.b16 %v865
        %v905 = vunpack.c.l.b16 %v866
        %v906 = vunpack.c.l.b16 %v867
        %v907 = vunpack.c.l.b16 %v868
        %v908 = vunpack.c.l.b16 %v869
        %v909 = vunpack.c.l.b16 %v870
        %v910 = vunpack.c.l.b16 %v871
        %v911 = vunpack.c.l.b16 %v872
        %v912 = vunpack.c.l.b16 %v873
        %v913 = vpack.c.b16 %v898, %v897
        %v914 = vpack.c.b16 %v900, %v899
        %v915 = vpack.c.b16 %v902, %v901
        %v916 = vpack.c.b16 %v904, %v903
        %v917 = vpack.c.b16 %v906, %v905
        %v918 = vpack.c.b16 %v908, %v907
        %v919 = vpack.c.b16 %v910, %v909
        %v920 = vpack.c.b16 %v912, %v911
        %929 = vmatprep.subr.bf16.mxu0 0
        %930 = vmatpush1.bf16.msra.mxu0 %v913
        %931 = vmatprep.subr.bf16.mxu0 0
        %932 = vmatpush1.bf16.msra.mxu0 %v914
        %933 = vmatprep.subr.bf16.mxu0 0
        %934 = vmatpush1.bf16.msra.mxu0 %v915
        %935 = vmatprep.subr.bf16.mxu0 0
        %936 = vmatpush1.bf16.msra.mxu0 %v916
        %937 = vmatprep.subr.bf16.mxu0 0
        %938 = vmatpush1.bf16.msra.mxu0 %v917
        %939 = vmatprep.subr.bf16.mxu0 0
        %940 = vmatpush1.bf16.msra.mxu0 %v918
        %941 = vmatprep.subr.bf16.mxu0 0
        %942 = vmatpush1.bf16.msra.mxu0 %v919
        %943 = vmatprep.subr.bf16.mxu0 0
        %944 = vmatpush1.bf16.msra.mxu0 %v920
        %945 = vmatprep.subr.bf16.mxu0 0
        %946 = vmatpush1.bf16.msra.mxu0 0
        %947 = vmatprep.subr.bf16.mxu0 0
        %948 = vmatpush1.bf16.msra.mxu0 0
        %949 = vmatprep.subr.bf16.mxu0 0
        %950 = vmatpush1.bf16.msra.mxu0 0
        %951 = vmatprep.subr.bf16.mxu0 0
        %952 = vmatpush1.bf16.msra.mxu0 0
        %953 = vmatprep.subr.bf16.mxu0 0
        %954 = vmatpush1.bf16.msra.mxu0 0
        %955 = vmatprep.subr.bf16.mxu0 0
        %956 = vmatpush1.bf16.msra.mxu0 0
        %957 = vmatprep.subr.bf16.mxu0 0
        %958 = vmatpush1.bf16.msra.mxu0 0
        %959 = vmatprep.subr.bf16.mxu0 0
        %960 = vmatpush1.bf16.msra.mxu0 0
        %961 = vmatprep.mubr.bf16.mxu0 0
        %962 = vmatmul.mubr.bf16.gmra.mrb[0].mxu0 %v850
        %v963 = vpop.f32.mrb[0].mxu0
        %v964 = vadd.f32 %v879, %v963
        %v965 = vpop.f32.mrb[0].mxu0
        %v966 = vpop.f32.mrb[0].mxu0
        %v967 = vadd.f32 %v879, %v966
        %v968 = vpop.f32.mrb[0].mxu0
        %969 = vmatprep.mubr.bf16.mxu0 0
        %970 = vmatmul.mubr.bf16.gmra.mrb[0].mxu0 %v851
        %v971 = vpop.f32.mrb[0].mxu0
        %v972 = vadd.f32 %v879, %v971
        %v973 = vpop.f32.mrb[0].mxu0
        %v974 = vpop.f32.mrb[0].mxu0
        %v975 = vadd.f32 %v879, %v974
        %v976 = vpop.f32.mrb[0].mxu0
        %977 = vmatprep.mubr.bf16.mxu0 0
        %978 = vmatmul.mubr.bf16.gmra.mrb[0].mxu0 %v852
        %v979 = vpop.f32.mrb[0].mxu0
        %v980 = vadd.f32 %v879, %v979
        %v981 = vpop.f32.mrb[0].mxu0
        %v982 = vpop.f32.mrb[0].mxu0
        %v983 = vadd.f32 %v879, %v982
        %v984 = vpop.f32.mrb[0].mxu0
        %985 = vmatprep.mubr.bf16.mxu0 0
        %986 = vmatmul.mubr.bf16.gmra.mrb[0].mxu0 %v853
        %v987 = vpop.f32.mrb[0].mxu0
        %v988 = vadd.f32 %v879, %v987
        %v989 = vpop.f32.mrb[0].mxu0
        %v990 = vpop.f32.mrb[0].mxu0
        %v991 = vadd.f32 %v879, %v990
        %v992 = vpop.f32.mrb[0].mxu0
        %993 = vmatprep.mubr.bf16.mxu0 0
        %994 = vmatmul.mubr.bf16.gmra.mrb[0].mxu0 %v854
        %v995 = vpop.f32.mrb[0].mxu0
        %v996 = vadd.f32 %v879, %v995
        %v997 = vpop.f32.mrb[0].mxu0
        %v998 = vpop.f32.mrb[0].mxu0
        %v999 = vadd.f32 %v879, %v998
        %v1000 = vpop.f32.mrb[0].mxu0
        %1001 = vmatprep.mubr.bf16.mxu0 0
        %1002 = vmatmul.mubr.bf16.gmra.mrb[0].mxu0 %v855
        %v1003 = vpop.f32.mrb[0].mxu0
        %v1004 = vadd.f32 %v879, %v1003
        %v1005 = vpop.f32.mrb[0].mxu0
        %v1006 = vpop.f32.mrb[0].mxu0
        %v1007 = vadd.f32 %v879, %v1006
        %v1008 = vpop.f32.mrb[0].mxu0
        %1009 = vmatprep.mubr.bf16.mxu0 0
        %1010 = vmatmul.mubr.bf16.gmra.mrb[0].mxu0 %v856
        %v1011 = vpop.f32.mrb[0].mxu0
        %v1012 = vadd.f32 %v879, %v1011
        %v1013 = vpop.f32.mrb[0].mxu0
        %v1014 = vpop.f32.mrb[0].mxu0
        %v1015 = vadd.f32 %v879, %v1014
        %v1016 = vpop.f32.mrb[0].mxu0
        %1017 = vmatprep.mubr.bf16.mxu0 0
        %1018 = vmatmul.mubr.bf16.gmra.mrb[0].mxu0 %v857
        %v1019 = vpop.f32.mrb[0].mxu0
        %v1020 = vadd.f32 %v879, %v1019
        %v1021 = vpop.f32.mrb[0].mxu0
        %v1022 = vpop.f32.mrb[0].mxu0
        %v1023 = vadd.f32 %v879, %v1022
        %v1024 = vpop.f32.mrb[0].mxu0
        %1025 = vdwg.mxu0
        %vm1026 = vcmask 64512
        %1027 = vst.msk [vmem:[%s343] sm:$0xff] %vm1026, %v964
        %1028 = vst.msk [vmem:[%s343 + $0x8] sm:$0xff] %vm1026, %v967
        %1029 = vst.msk [vmem:[%s343 + $0x10] sm:$0xff] %vm1026, %v972
        %1030 = vst.msk [vmem:[%s343 + $0x18] sm:$0xff] %vm1026, %v975
        %1031 = vst.msk [vmem:[%s343 + $0x20] sm:$0xff] %vm1026, %v980
        %1032 = vst.msk [vmem:[%s343 + $0x28] sm:$0xff] %vm1026, %v983
        %1033 = vst.msk [vmem:[%s343 + $0x30] sm:$0xff] %vm1026, %v988
        %1034 = vst.msk [vmem:[%s343 + $0x38] sm:$0xff] %vm1026, %v991
        %1035 = vst.msk [vmem:[%s343 + $0x40] sm:$0xff] %vm1026, %v996
        %1036 = vst.msk [vmem:[%s343 + $0x48] sm:$0xff] %vm1026, %v999
        %1037 = vst.msk [vmem:[%s343 + $0x50] sm:$0xff] %vm1026, %v1004
        %1038 = vst.msk [vmem:[%s343 + $0x58] sm:$0xff] %vm1026, %v1007
        %1039 = vst.msk [vmem:[%s343 + $0x60] sm:$0xff] %vm1026, %v1012
        %1040 = vst.msk [vmem:[%s343 + $0x68] sm:$0xff] %vm1026, %v1015
        %1041 = vst.msk [vmem:[%s343 + $0x70] sm:$0xff] %vm1026, %v1020
        %1042 = vst.msk [vmem:[%s343 + $0x78] sm:$0xff] %vm1026, %v1023
        %s1043 = smul.u32 16, %s23
        %p1044 = scmp.lt.s32.totalorder %s1043, 31
        %s1045 = scalar_select %p1044, %s1043, 31
        %s1046 = smul.addr %s1045, 8
        %s1047 = scalar_lea.vmem %s7, %s1046
        // Predicated region
        $region65: #{tpu_custom_call.1} parent=47 // pred_check
          %p1048 = pneg %p193
        $region66: #{tpu_custom_call.1} parent=47 // pred_check_branch
          %1050 = sbr.rel (%p1048) target = $region68
        $region67: #{tpu_custom_call.1} parent=47 // pred_region
          %s1051 = smul.u32 16, %s23
        $region68: #{tpu_custom_call.1} parent=47 // pred_fallthru
          _
      $region48: #{tpu_custom_call.1} parent=5 // pred_fallthru
        _
      %p1052 = scmp.le.s32.totalorder 2, %s18
      // Predicated region
      $region69: #{tpu_custom_call.1} parent=5 // pred_check
        %p1053 = pneg %p1052
      $region70: #{tpu_custom_call.1} parent=5 // pred_check_branch
        %1055 = sbr.rel (%p1053) target = $region72
      $region71: #{tpu_custom_call.1} parent=5 // pred_region
        %s1056 = ssub.s32 %s18, 2
        // Predicated region
        $region73: #{tpu_custom_call.1} parent=71 // pred_check
          %p1057 = pneg %p199
        $region74: #{tpu_custom_call.1} parent=71 // pred_check_branch
          %1059 = sbr.rel (%p1057) target = $region76
        $region75: #{tpu_custom_call.1} parent=71 // pred_region
          %s1060 = smul.u32 16, %s24
          %p1061 = scmp.lt.s32.totalorder %s1060, 31
          %s1062 = scalar_select %p1061, %s1060, 31
          %s1063 = smul.addr %s1062, 8
          %s1064 = scalar_lea.vmem %s7, %s1063
        $region76: #{tpu_custom_call.1} parent=71 // pred_fallthru
          _
      $region72: #{tpu_custom_call.1} parent=5 // pred_fallthru
        _
    $region6: #{tpu_custom_call.1} parent=1 // loop_footer
      %s22 = sadd.s32 1, %s18
    $region7: #{tpu_custom_call.1} parent=1 // loop_footer_branch
      %17 = sbr.rel target = $region3
    $region8: #{tpu_custom_call.1} parent=1 // loop_exit
      _
    %1065 = vsyncpa [#allocation3], 1
    %s1066 = scalar_lea.sflag [#allocation3], 1
    %1067 = vsyncpa %s1066, 1
    %1068 = vsyncpa [#allocation5], 1
    %1069 = vsyncpa [#allocation8], 1

// kernel: tpu_custom_call.1
$region0: #{tpu_custom_call.1}
  #allocation0 [shape = 'u32[]', space=smem, size = 0x4, offset = 0x4, fixed_abs, tag = 'smem constant byte address 0x4 - core index']
  #allocation1 [shape = 'u32[144,128]{1,0:T(1,128)}', space=vmem, size = 0x12000, scoped, tag = 'internal scratch']
  %s0 = inlined_call_operand.hbm [shape: bf16[256,128], index: 0, kind: input, shape index: {}]
  %s1 = inlined_call_operand.hbm [shape: bf16[128,128], index: 1, kind: input, shape index: {}]
  %s2 = inlined_call_operand.vmem [shape: f32[1,128], index: 2, kind: input, shape index: {}]
  %s3 = inlined_call_operand.hbm [shape: bf16[128,128], index: 3, kind: input, shape index: {}]
  %s4 = inlined_call_operand.vmem [shape: f32[1,128], index: 4, kind: input, shape index: {}]
  %s5 = inlined_call_operand.hbm [shape: bf16[128,128], index: 5, kind: input, shape index: {}]
  %s6 = inlined_call_operand.vmem [shape: f32[1,128], index: 6, kind: input, shape index: {}]
  %s7 = inlined_call_operand.vmem [shape: f32[256,8], index: 7, kind: output, shape index: {}]
  %s8 = sld [smem:[#allocation0]]
  $region77: #{tpu_custom_call.1} parent=0
    _
  %s10 = ssub.s32 1, %s8
  %s11 = scalar_select 0, %s10, %s8
  $region1: #{tpu_custom_call.1} parent=0
    #allocation2 [shape = 'u8[65536]{0}', space=vmem, size = 0x10000, scoped, tag = 'input window, operand 0']
    #allocation3 [shape = 's32[2]{0}', space=sflag, size = 0x8, scoped, tag = 'scoped memory for tpu_custom_call.1']
    #allocation4 [shape = 'u8[32768]{0}', space=vmem, size = 0x8000, scoped, tag = 'input window, operand 1, single buffered']
    #allocation5 [shape = 's32[1]{0}', space=sflag, size = 0x4, scoped, tag = 'scoped memory for tpu_custom_call.1']
    #allocation6 [shape = 'u8[32768]{0}', space=vmem, size = 0x8000, scoped, tag = 'input window, operand 3, single buffered']
    #allocation7 [shape = 'u8[32768]{0}', space=vmem, size = 0x8000, scoped, tag = 'input window, operand 5, single buffered']
    #allocation8 [shape = 's32[1]{0}', space=sflag, size = 0x4, scoped, tag = 'scoped memory for tpu_custom_call.1']
    %12 = vsyncpa [#allocation3], 0
    %s13 = scalar_lea.sflag [#allocation3], 1
    %14 = vsyncpa %s13, 0
    %15 = vsyncpa [#allocation5], 0
    %16 = vsyncpa [#allocation8], 0
    loop: start=0, step=1, limit=4
    $region2: #{tpu_custom_call.1} parent=1 // loop_pre_header
      _
    $region3: #{tpu_custom_call.1} parent=1 // loop_header
      %s18 = sphi 0, %s22
      %p19 = scmp.ge.s32.totalorder %s18, 4
      %s28 = sphi 0, %s30
      %s31 = sphi 0, %s28
      %s32 = sphi 0, %s31
      %s48 = sphi 0, %s32
      %s52 = sphi 0, %s52
      %s54 = sphi 0, %s52
      %s55 = sphi 0, %s54
      %s69 = sphi 0, %s55
      %s73 = sphi 0, %s73
      %s75 = sphi 0, %s73
      %s76 = sphi 0, %s75
      %s90 = sphi 0, %s76
      %s94 = sphi 0, %s94
      %s96 = sphi 0, %s94
      %s97 = sphi 0, %s96
      %s111 = sphi 0, %s97
      %s115 = sphi 0, %s115
      %s117 = sphi 0, %s115
      %s118 = sphi 0, %s117
      %s132 = sphi 0, %s118
      %s136 = sphi 0, %s136
      %s138 = sphi 0, %s136
      %s139 = sphi 0, %s138
      %s153 = sphi 0, %s139
      %s157 = sphi 0, %s157
      %s159 = sphi 0, %s157
      %s160 = sphi 0, %s159
      %s174 = sphi 0, %s160
      %s180 = sphi 0, %s182
      %s183 = sphi 0, %s180
      %s184 = sphi 0, %s183
      %s200 = sphi 0, %s184
    $region4: #{tpu_custom_call.1} parent=1 // loop_header_branch
      %21 = sbr.rel (%p19) target = $region8
    $region5: #{tpu_custom_call.1} parent=1 // loop_body
      %s23 = ssub.s32 %s18, 1
      %s24 = ssub.s32 %s18, 2
      %s25 = sadd.s32 %s18, 1
      %s26 = ssub.s32 %s18, %s25
      %p27 = scmp.eq.s32.totalorder %s26, 0
      %s29 = sadd.s32 %s28, 1
      %s30 = scalar_select %p27, %s28, %s29
      %p33 = pneg %p27
      %p34 = scmp.eq.s32.totalorder %s18, 1
      %p35 = por %p33, %p34
      %p36 = scmp.ne.s32.totalorder %s28, %s31
      %p37 = scmp.eq.s32.totalorder %s18, 0
      %p38 = por %p36, %p37
      %p39 = scmp.ne.s32.totalorder %s28, %s31
      %p40 = scmp.eq.s32.totalorder %s23, 1
      %p41 = por %p39, %p40
      %p42 = scmp.ne.s32.totalorder %s31, %s32
      %p43 = scmp.eq.s32.totalorder %s23, 0
      %p44 = por %p42, %p43
      %p45 = scmp.ne.s32.totalorder %s31, %s32
      %p46 = scmp.eq.s32.totalorder %s24, 1
      %p47 = por %p45, %p46
      %p49 = scmp.ne.s32.totalorder %s32, %s48
      %p50 = scmp.eq.s32.totalorder %s24, 0
      %p51 = por %p49, %p50
      %s53 = sadd.s32 %s52, 1
      %p56 = scmp.eq.s32.totalorder %s18, 1
      %p57 = scmp.ne.s32.totalorder %s52, %s54
      %p58 = scmp.eq.s32.totalorder %s18, 0
      %p59 = por %p57, %p58
      %p60 = scmp.ne.s32.totalorder %s52, %s54
      %p61 = scmp.eq.s32.totalorder %s23, 1
      %p62 = por %p60, %p61
      %p63 = scmp.ne.s32.totalorder %s54, %s55
      %p64 = scmp.eq.s32.totalorder %s23, 0
      %p65 = por %p63, %p64
      %p66 = scmp.ne.s32.totalorder %s54, %s55
      %p67 = scmp.eq.s32.totalorder %s24, 1
      %p68 = por %p66, %p67
      %p70 = scmp.ne.s32.totalorder %s55, %s69
      %p71 = scmp.eq.s32.totalorder %s24, 0
      %p72 = por %p70, %p71
      %s74 = sadd.s32 %s73, 1
      %p77 = scmp.eq.s32.totalorder %s18, 1
      %p78 = scmp.ne.s32.totalorder %s73, %s75
      %p79 = scmp.eq.s32.totalorder %s18, 0
      %p80 = por %p78, %p79
      %p81 = scmp.ne.s32.totalorder %s73, %s75
      %p82 = scmp.eq.s32.totalorder %s23, 1
      %p83 = por %p81, %p82
      %p84 = scmp.ne.s32.totalorder %s75, %s76
      %p85 = scmp.eq.s32.totalorder %s23, 0
      %p86 = por %p84, %p85
      %p87 = scmp.ne.s32.totalorder %s75, %s76
      %p88 = scmp.eq.s32.totalorder %s24, 1
      %p89 = por %p87, %p88
      %p91 = scmp.ne.s32.totalorder %s76, %s90
      %p92 = scmp.eq.s32.totalorder %s24, 0
      %p93 = por %p91, %p92
      %s95 = sadd.s32 %s94, 1
      %p98 = scmp.eq.s32.totalorder %s18, 1
      %p99 = scmp.ne.s32.totalorder %s94, %s96
      %p100 = scmp.eq.s32.totalorder %s18, 0
      %p101 = por %p99, %p100
      %p102 = scmp.ne.s32.totalorder %s94, %s96
      %p103 = scmp.eq.s32.totalorder %s23, 1
      %p104 = por %p102, %p103
      %p105 = scmp.ne.s32.totalorder %s96, %s97
      %p106 = scmp.eq.s32.totalorder %s23, 0
      %p107 = por %p105, %p106
      %p108 = scmp.ne.s32.totalorder %s96, %s97
      %p109 = scmp.eq.s32.totalorder %s24, 1
      %p110 = por %p108, %p109
      %p112 = scmp.ne.s32.totalorder %s97, %s111
      %p113 = scmp.eq.s32.totalorder %s24, 0
      %p114 = por %p112, %p113
      %s116 = sadd.s32 %s115, 1
      %p119 = scmp.eq.s32.totalorder %s18, 1
      %p120 = scmp.ne.s32.totalorder %s115, %s117
      %p121 = scmp.eq.s32.totalorder %s18, 0
      %p122 = por %p120, %p121
      %p123 = scmp.ne.s32.totalorder %s115, %s117
      %p124 = scmp.eq.s32.totalorder %s23, 1
      %p125 = por %p123, %p124
      %p126 = scmp.ne.s32.totalorder %s117, %s118
      %p127 = scmp.eq.s32.totalorder %s23, 0
      %p128 = por %p126, %p127
      %p129 = scmp.ne.s32.totalorder %s117, %s118
      %p130 = scmp.eq.s32.totalorder %s24, 1
      %p131 = por %p129, %p130
      %p133 = scmp.ne.s32.totalorder %s118, %s132
      %p134 = scmp.eq.s32.totalorder %s24, 0
      %p135 = por %p133, %p134
      %s137 = sadd.s32 %s136, 1
      %p140 = scmp.eq.s32.totalorder %s18, 1
      %p141 = scmp.ne.s32.totalorder %s136, %s138
      %p142 = scmp.eq.s32.totalorder %s18, 0
      %p143 = por %p141, %p142
      %p144 = scmp.ne.s32.totalorder %s136, %s138
      %p145 = scmp.eq.s32.totalorder %s23, 1
      %p146 = por %p144, %p145
      %p147 = scmp.ne.s32.totalorder %s138, %s139
      %p148 = scmp.eq.s32.totalorder %s23, 0
      %p149 = por %p147, %p148
      %p150 = scmp.ne.s32.totalorder %s138, %s139
      %p151 = scmp.eq.s32.totalorder %s24, 1
      %p152 = por %p150, %p151
      %p154 = scmp.ne.s32.totalorder %s139, %s153
      %p155 = scmp.eq.s32.totalorder %s24, 0
      %p156 = por %p154, %p155
      %s158 = sadd.s32 %s157, 1
      %p161 = scmp.eq.s32.totalorder %s18, 1
      %p162 = scmp.ne.s32.totalorder %s157, %s159
      %p163 = scmp.eq.s32.totalorder %s18, 0
      %p164 = por %p162, %p163
      %p165 = scmp.ne.s32.totalorder %s157, %s159
      %p166 = scmp.eq.s32.totalorder %s23, 1
      %p167 = por %p165, %p166
      %p168 = scmp.ne.s32.totalorder %s159, %s160
      %p169 = scmp.eq.s32.totalorder %s23, 0
      %p170 = por %p168, %p169
      %p171 = scmp.ne.s32.totalorder %s159, %s160
      %p172 = scmp.eq.s32.totalorder %s24, 1
      %p173 = por %p171, %p172
      %p175 = scmp.ne.s32.totalorder %s160, %s174
      %p176 = scmp.eq.s32.totalorder %s24, 0
      %p177 = por %p175, %p176
      %s178 = ssub.s32 %s18, %s25
      %p179 = scmp.eq.s32.totalorder %s178, 0
      %s181 = sadd.s32 %s180, 1
      %s182 = scalar_select %p179, %s180, %s181
      %p185 = pneg %p179
      %p186 = scmp.eq.s32.totalorder %s18, 1
      %p187 = por %p185, %p186
      %p188 = scmp.ne.s32.totalorder %s180, %s183
      %p189 = scmp.eq.s32.totalorder %s18, 0
      %p190 = por %p188, %p189
      %p191 = scmp.ne.s32.totalorder %s180, %s183
      %p192 = scmp.eq.s32.totalorder %s23, 1
      %p193 = por %p191, %p192
      %p194 = scmp.ne.s32.totalorder %s183, %s184
      %p195 = scmp.eq.s32.totalorder %s23, 0
      %p196 = por %p194, %p195
      %p197 = scmp.ne.s32.totalorder %s183, %s184
      %p198 = scmp.eq.s32.totalorder %s24, 1
      %p199 = por %p197, %p198
      %p201 = scmp.ne.s32.totalorder %s184, %s200
      %p202 = scmp.eq.s32.totalorder %s24, 0
      %p203 = por %p201, %p202
      %p204 = scmp.le.s32.totalorder 1, %s18
      %p205 = scmp.lt.s32.totalorder %s18, 3
      %p206 = pnand %p204, %p205
      %p207 = pneg %p206
      // Predicated region
      $region9: #{tpu_custom_call.1} parent=5 // pred_check
        _
      $region10: #{tpu_custom_call.1} parent=5 // pred_check_branch
        %209 = sbr.rel (%p206) target = $region12
      $region11: #{tpu_custom_call.1} parent=5 // pred_region
        %s210 = ssub.s32 %s18, 1
        // Predicated region
        $region13: #{tpu_custom_call.1} parent=11 // pred_check
          %p211 = pneg %p65
        $region14: #{tpu_custom_call.1} parent=11 // pred_check_branch
          %213 = sbr.rel (%p211) target = $region16
        $region15: #{tpu_custom_call.1} parent=11 // pred_region
          %s215 = ssub.s32 1024, 1024
          %216 = vsyncadd [#allocation5], %s215
          %s217 = sshll.u32 [#allocation4], 4
          %s218 = int_to_ptr.vmem [resolvable:$true] %s217
          %223 = dma.hbm_to_vmem [thread:$0]  %s1, 1024, %s218, [#allocation5], 64, 64, 4
        $region16: #{tpu_custom_call.1} parent=11 // pred_fallthru
          _
        // Predicated region
        $region17: #{tpu_custom_call.1} parent=11 // pred_check
          %p224 = pneg %p86
        $region18: #{tpu_custom_call.1} parent=11 // pred_check_branch
          %226 = sbr.rel (%p224) target = $region20
        $region19: #{tpu_custom_call.1} parent=11 // pred_region
          _
        $region20: #{tpu_custom_call.1} parent=11 // pred_fallthru
          _
        // Predicated region
        $region21: #{tpu_custom_call.1} parent=11 // pred_check
          %p227 = pneg %p107
        $region22: #{tpu_custom_call.1} parent=11 // pred_check_branch
          %229 = sbr.rel (%p227) target = $region24
        $region23: #{tpu_custom_call.1} parent=11 // pred_region
          %s231 = ssub.s32 1024, 1024
          %232 = vsyncadd [#allocation5], %s231
          %s233 = sshll.u32 [#allocation6], 4
          %s234 = int_to_ptr.vmem [resolvable:$true] %s233
          %239 = dma.hbm_to_vmem [thread:$0]  %s3, 1024, %s234, [#allocation5], 64, 64, 4
        $region24: #{tpu_custom_call.1} parent=11 // pred_fallthru
          _
        // Predicated region
        $region25: #{tpu_custom_call.1} parent=11 // pred_check
          %p240 = pneg %p128
        $region26: #{tpu_custom_call.1} parent=11 // pred_check_branch
          %242 = sbr.rel (%p240) target = $region28
        $region27: #{tpu_custom_call.1} parent=11 // pred_region
          _
        $region28: #{tpu_custom_call.1} parent=11 // pred_fallthru
          _
        // Predicated region
        $region29: #{tpu_custom_call.1} parent=11 // pred_check
          %p243 = pneg %p149
        $region30: #{tpu_custom_call.1} parent=11 // pred_check_branch
          %245 = sbr.rel (%p243) target = $region32
        $region31: #{tpu_custom_call.1} parent=11 // pred_region
          %s247 = ssub.s32 1024, 1024
          %248 = vsyncadd [#allocation8], %s247
          %s249 = sshll.u32 [#allocation7], 4
          %s250 = int_to_ptr.vmem [resolvable:$true] %s249
          %255 = dma.hbm_to_vmem [thread:$0]  %s5, 1024, %s250, [#allocation8], 64, 64, 4
        $region32: #{tpu_custom_call.1} parent=11 // pred_fallthru
          _
        // Predicated region
        $region33: #{tpu_custom_call.1} parent=11 // pred_check
          %p256 = pneg %p170
        $region34: #{tpu_custom_call.1} parent=11 // pred_check_branch
          %258 = sbr.rel (%p256) target = $region36
        $region35: #{tpu_custom_call.1} parent=11 // pred_region
          _
        $region36: #{tpu_custom_call.1} parent=11 // pred_fallthru
          _
      $region12: #{tpu_custom_call.1} parent=5 // pred_fallthru
        _
      %p259 = scmp.lt.s32.totalorder %s18, 2
      // Predicated region
      $region37: #{tpu_custom_call.1} parent=5 // pred_check
        %p260 = pneg %p259
      $region38: #{tpu_custom_call.1} parent=5 // pred_check_branch
        %262 = sbr.rel (%p260) target = $region40
      $region39: #{tpu_custom_call.1} parent=5 // pred_region
        // Predicated region
        $region41: #{tpu_custom_call.1} parent=39 // pred_check
          %p263 = pneg %p38
        $region42: #{tpu_custom_call.1} parent=39 // pred_check_branch
          %265 = sbr.rel (%p263) target = $region44
        $region43: #{tpu_custom_call.1} parent=39 // pred_region
          %s266 = sand.u32 %s28, 1
          %s267 = scalar_lea.sflag [#allocation3], %s266
          %s268 = sand.u32 %s28, 1
          %s269 = smul.addr %s268, 64
          %s270 = scalar_lea.vmem [#allocation2], %s269
          %s271 = smul.u32 16, %s18
          %s273 = ssub.s32 1024, 1024
          %274 = vsyncadd %s267, %s273
          %s275 = smul.addr %s271, 64
          %s276 = scalar_lea.hbm %s0, %s275
          %s277 = sshll.u32 %s270, 4
          %s278 = int_to_ptr.vmem [resolvable:$true] %s277
          %283 = dma.hbm_to_vmem [thread:$0]  %s276, 1024, %s278, %s267, 64, 64, 4
        $region44: #{tpu_custom_call.1} parent=39 // pred_fallthru
          _
      $region40: #{tpu_custom_call.1} parent=5 // pred_fallthru
        _
      %p284 = scmp.le.s32.totalorder 1, %s18
      %p285 = scmp.lt.s32.totalorder %s18, 3
      %p286 = pnand %p284, %p285
      %p287 = pneg %p286
      // Predicated region
      $region45: #{tpu_custom_call.1} parent=5 // pred_check
        _
      $region46: #{tpu_custom_call.1} parent=5 // pred_check_branch
        %289 = sbr.rel (%p286) target = $region48
      $region47: #{tpu_custom_call.1} parent=5 // pred_region
        %s290 = ssub.s32 %s18, 1
        %s291 = sand.u32 %s31, 1
        %s292 = scalar_lea.sflag [#allocation3], %s291
        %s293 = sand.u32 %s31, 1
        %s294 = smul.addr %s293, 64
        %s295 = scalar_lea.vmem [#allocation2], %s294
        // Predicated region
        $region49: #{tpu_custom_call.1} parent=47 // pred_check
          %p296 = pneg %p44
        $region50: #{tpu_custom_call.1} parent=47 // pred_check_branch
          %298 = sbr.rel (%p296) target = $region52
        $region51: #{tpu_custom_call.1} parent=47 // pred_region
          %299 = dma.done %s292, 1024
        $region52: #{tpu_custom_call.1} parent=47 // pred_fallthru
          _
        // Predicated region
        $region53: #{tpu_custom_call.1} parent=47 // pred_check
          %p300 = pneg %p65
        $region54: #{tpu_custom_call.1} parent=47 // pred_check_branch
          %302 = sbr.rel (%p300) target = $region56
        $region55: #{tpu_custom_call.1} parent=47 // pred_region
          %303 = dma.done [#allocation5], 1024
        $region56: #{tpu_custom_call.1} parent=47 // pred_fallthru
          _
        // Predicated region
        $region57: #{tpu_custom_call.1} parent=47 // pred_check
          %p304 = pneg %p107
        $region58: #{tpu_custom_call.1} parent=47 // pred_check_branch
          %306 = sbr.rel (%p304) target = $region60
        $region59: #{tpu_custom_call.1} parent=47 // pred_region
          %307 = dma.done [#allocation5], 1024
        $region60: #{tpu_custom_call.1} parent=47 // pred_fallthru
          _
        // Predicated region
        $region61: #{tpu_custom_call.1} parent=47 // pred_check
          %p308 = pneg %p149
        $region62: #{tpu_custom_call.1} parent=47 // pred_check_branch
          %310 = sbr.rel (%p308) target = $region64
        $region63: #{tpu_custom_call.1} parent=47 // pred_region
          %311 = dma.done [#allocation8], 1024
        $region64: #{tpu_custom_call.1} parent=47 // pred_fallthru
          _
        %s312 = sand.u32 %s31, 1
        %s313 = scalar_lea.sflag [#allocation3], %s312
        %s314 = sand.u32 %s31, 1
        %s315 = smul.addr %s314, 64
        %s316 = scalar_lea.vmem [#allocation2], %s315
        %p317 = pneg %p44
        %p318 = pneg %p41
        %p319 = pneg %p65
        %p320 = pneg %p62
        %p321 = pneg %p86
        %p322 = pneg %p83
        %p323 = pneg %p107
        %p324 = pneg %p104
        %p325 = pneg %p128
        %p326 = pneg %p125
        %p327 = pneg %p149
        %p328 = pneg %p146
        %p329 = pneg %p170
        %p330 = pneg %p167
        %p331 = pneg %p196
        %p332 = pneg %p193
        %s333 = smul.u32 16, %s23
        %p334 = scmp.lt.s32.totalorder %s333, 31
        %s335 = scalar_select %p334, %s333, 31
        %s336 = smul.addr %s335, 8
        %s337 = scalar_lea.vmem %s7, %s336
        %s338 = smul.u32 16, %s23
        %s339 = smul.u32 16, %s23
        %p340 = scmp.lt.s32.totalorder %s339, 31
        %s341 = scalar_select %p340, %s339, 31
        %s342 = smul.addr %s341, 8
        %s343 = scalar_lea.vmem %s7, %s342
        %s344 = smul.u32 16, %s23
        %v346 = vld [vmem:[%s295] sm:$0xf]
        %v347 = vld [vmem:[%s295 + $0x4] sm:$0xf]
        %v348 = vld [vmem:[%s295 + $0x8] sm:$0xf]
        %v349 = vld [vmem:[%s295 + $0xc] sm:$0xf]
        %v350 = vld [vmem:[%s295 + $0x10] sm:$0xf]
        %v351 = vld [vmem:[%s295 + $0x14] sm:$0xf]
        %v352 = vld [vmem:[%s295 + $0x18] sm:$0xf]
        %v353 = vld [vmem:[%s295 + $0x1c] sm:$0xf]
        %v354 = vld [vmem:[%s295 + $0x20] sm:$0xf]
        %v355 = vld [vmem:[%s295 + $0x24] sm:$0xf]
        %v356 = vld [vmem:[%s295 + $0x28] sm:$0xf]
        %v357 = vld [vmem:[%s295 + $0x2c] sm:$0xf]
        %v358 = vld [vmem:[%s295 + $0x30] sm:$0xf]
        %v359 = vld [vmem:[%s295 + $0x34] sm:$0xf]
        %v360 = vld [vmem:[%s295 + $0x38] sm:$0xf]
        %v361 = vld [vmem:[%s295 + $0x3c] sm:$0xf]
        %v362 = vld [vmem:[#allocation4] sm:$0xf]
        %v363 = vld [vmem:[#allocation4 + $0x4] sm:$0xf]
        %v364 = vld [vmem:[#allocation4 + $0x8] sm:$0xf]
        %v365 = vld [vmem:[#allocation4 + $0xc] sm:$0xf]
        %v366 = vld [vmem:[#allocation4 + $0x10] sm:$0xf]
        %v367 = vld [vmem:[#allocation4 + $0x14] sm:$0xf]
        %v368 = vld [vmem:[#allocation4 + $0x18] sm:$0xf]
        %v369 = vld [vmem:[#allocation4 + $0x1c] sm:$0xf]
        %v370 = vld [vmem:[#allocation4 + $0x20] sm:$0xf]
        %v371 = vld [vmem:[#allocation4 + $0x24] sm:$0xf]
        %v372 = vld [vmem:[#allocation4 + $0x28] sm:$0xf]
        %v373 = vld [vmem:[#allocation4 + $0x2c] sm:$0xf]
        %v374 = vld [vmem:[#allocation4 + $0x30] sm:$0xf]
        %v375 = vld [vmem:[#allocation4 + $0x34] sm:$0xf]
        %v376 = vld [vmem:[#allocation4 + $0x38] sm:$0xf]
        %v377 = vld [vmem:[#allocation4 + $0x3c] sm:$0xf]
        %v378 = vld [vmem:[%s2] sm:$0x1]
        %v380 = vlaneseq
        %v381 = vshrl.u32 %v380, 7
        %v382 = vsub.s32 0, %v381
        %v383 = vrot.slane %v378, %v382
        %v401 = vunpack.c.l.b16 %v346
        %v402 = vunpack.c.l.b16 %v347
        %v403 = vunpack.c.l.b16 %v348
        %v404 = vunpack.c.l.b16 %v349
        %v405 = vunpack.c.l.b16 %v350
        %v406 = vunpack.c.l.b16 %v351
        %v407 = vunpack.c.l.b16 %v352
        %v408 = vunpack.c.l.b16 %v353
        %v409 = vunpack.c.l.b16 %v354
        %v410 = vunpack.c.l.b16 %v355
        %v411 = vunpack.c.l.b16 %v356
        %v412 = vunpack.c.l.b16 %v357
        %v413 = vunpack.c.l.b16 %v358
        %v414 = vunpack.c.l.b16 %v359
        %v415 = vunpack.c.l.b16 %v360
        %v416 = vunpack.c.l.b16 %v361
        %v417 = vpack.c.b16 %v402, %v401
        %v418 = vpack.c.b16 %v404, %v403
        %v419 = vpack.c.b16 %v406, %v405
        %v420 = vpack.c.b16 %v408, %v407
        %v421 = vpack.c.b16 %v410, %v409
        %v422 = vpack.c.b16 %v412, %v411
        %v423 = vpack.c.b16 %v414, %v413
        %v424 = vpack.c.b16 %v416, %v415
        %v449 = vunpack.c.l.b16 %v362
        %v450 = vunpack.c.l.b16 %v363
        %v451 = vunpack.c.l.b16 %v364
        %v452 = vunpack.c.l.b16 %v365
        %v453 = vunpack.c.l.b16 %v366
        %v454 = vunpack.c.l.b16 %v367
        %v455 = vunpack.c.l.b16 %v368
        %v456 = vunpack.c.l.b16 %v369
        %v457 = vunpack.c.l.b16 %v370
        %v458 = vunpack.c.l.b16 %v371
        %v459 = vunpack.c.l.b16 %v372
        %v460 = vunpack.c.l.b16 %v373
        %v461 = vunpack.c.l.b16 %v374
        %v462 = vunpack.c.l.b16 %v375
        %v463 = vunpack.c.l.b16 %v376
        %v464 = vunpack.c.l.b16 %v377
        %v465 = vpack.c.b16 %v450, %v449
        %v466 = vpack.c.b16 %v452, %v451
        %v467 = vpack.c.b16 %v454, %v453
        %v468 = vpack.c.b16 %v456, %v455
        %v469 = vpack.c.b16 %v458, %v457
        %v470 = vpack.c.b16 %v460, %v459
        %v471 = vpack.c.b16 %v462, %v461
        %v472 = vpack.c.b16 %v464, %v463
        %481 = vmatprep.subr.bf16.mxu0 0
        %482 = vmatpush1.bf16.msra.mxu0 %v465
        %483 = vmatprep.subr.bf16.mxu0 0
        %484 = vmatpush1.bf16.msra.mxu0 %v466
        %485 = vmatprep.subr.bf16.mxu0 0
        %486 = vmatpush1.bf16.msra.mxu0 %v467
        %487 = vmatprep.subr.bf16.mxu0 0
        %488 = vmatpush1.bf16.msra.mxu0 %v468
        %489 = vmatprep.subr.bf16.mxu0 0
        %490 = vmatpush1.bf16.msra.mxu0 %v469
        %491 = vmatprep.subr.bf16.mxu0 0
        %492 = vmatpush1.bf16.msra.mxu0 %v470
        %493 = vmatprep.subr.bf16.mxu0 0
        %494 = vmatpush1.bf16.msra.mxu0 %v471
        %495 = vmatprep.subr.bf16.mxu0 0
        %496 = vmatpush1.bf16.msra.mxu0 %v472
        %497 = vmatprep.subr.bf16.mxu0 0
        %498 = vmatpush1.bf16.msra.mxu0 0
        %499 = vmatprep.subr.bf16.mxu0 0
        %500 = vmatpush1.bf16.msra.mxu0 0
        %501 = vmatprep.subr.bf16.mxu0 0
        %502 = vmatpush1.bf16.msra.mxu0 0
        %503 = vmatprep.subr.bf16.mxu0 0
        %504 = vmatpush1.bf16.msra.mxu0 0
        %505 = vmatprep.subr.bf16.mxu0 0
        %506 = vmatpush1.bf16.msra.mxu0 0
        %507 = vmatprep.subr.bf16.mxu0 0
        %508 = vmatpush1.bf16.msra.mxu0 0
        %509 = vmatprep.subr.bf16.mxu0 0
        %510 = vmatpush1.bf16.msra.mxu0 0
        %511 = vmatprep.subr.bf16.mxu0 0
        %512 = vmatpush1.bf16.msra.mxu0 0
        %513 = vmatprep.mubr.bf16.mxu0 0
        %514 = vmatmul.mubr.bf16.gmra.mrb[0].mxu0 %v417
        %v515 = vpop.f32.mrb[0].mxu0
        %v516 = vadd.f32 %v383, %v515
        %v517 = vpop.f32.mrb[0].mxu0
        %v518 = vpop.f32.mrb[0].mxu0
        %v519 = vadd.f32 %v383, %v518
        %v520 = vpop.f32.mrb[0].mxu0
        %521 = vmatprep.mubr.bf16.mxu0 0
        %522 = vmatmul.mubr.bf16.gmra.mrb[0].mxu0 %v418
        %v523 = vpop.f32.mrb[0].mxu0
        %v524 = vadd.f32 %v383, %v523
        %v525 = vpop.f32.mrb[0].mxu0
        %v526 = vpop.f32.mrb[0].mxu0
        %v527 = vadd.f32 %v383, %v526
        %v528 = vpop.f32.mrb[0].mxu0
        %529 = vmatprep.mubr.bf16.mxu0 0
        %530 = vmatmul.mubr.bf16.gmra.mrb[0].mxu0 %v419
        %v531 = vpop.f32.mrb[0].mxu0
        %v532 = vadd.f32 %v383, %v531
        %v533 = vpop.f32.mrb[0].mxu0
        %v534 = vpop.f32.mrb[0].mxu0
        %v535 = vadd.f32 %v383, %v534
        %v536 = vpop.f32.mrb[0].mxu0
        %537 = vmatprep.mubr.bf16.mxu0 0
        %538 = vmatmul.mubr.bf16.gmra.mrb[0].mxu0 %v420
        %v539 = vpop.f32.mrb[0].mxu0
        %v540 = vadd.f32 %v383, %v539
        %v541 = vpop.f32.mrb[0].mxu0
        %v542 = vpop.f32.mrb[0].mxu0
        %v543 = vadd.f32 %v383, %v542
        %v544 = vpop.f32.mrb[0].mxu0
        %545 = vmatprep.mubr.bf16.mxu0 0
        %546 = vmatmul.mubr.bf16.gmra.mrb[0].mxu0 %v421
        %v547 = vpop.f32.mrb[0].mxu0
        %v548 = vadd.f32 %v383, %v547
        %v549 = vpop.f32.mrb[0].mxu0
        %v550 = vpop.f32.mrb[0].mxu0
        %v551 = vadd.f32 %v383, %v550
        %v552 = vpop.f32.mrb[0].mxu0
        %553 = vmatprep.mubr.bf16.mxu0 0
        %554 = vmatmul.mubr.bf16.gmra.mrb[0].mxu0 %v422
        %v555 = vpop.f32.mrb[0].mxu0
        %v556 = vadd.f32 %v383, %v555
        %v557 = vpop.f32.mrb[0].mxu0
        %v558 = vpop.f32.mrb[0].mxu0
        %v559 = vadd.f32 %v383, %v558
        %v560 = vpop.f32.mrb[0].mxu0
        %561 = vmatprep.mubr.bf16.mxu0 0
        %562 = vmatmul.mubr.bf16.gmra.mrb[0].mxu0 %v423
        %v563 = vpop.f32.mrb[0].mxu0
        %v564 = vadd.f32 %v383, %v563
        %v565 = vpop.f32.mrb[0].mxu0
        %v566 = vpop.f32.mrb[0].mxu0
        %v567 = vadd.f32 %v383, %v566
        %v568 = vpop.f32.mrb[0].mxu0
        %569 = vmatprep.mubr.bf16.mxu0 0
        %570 = vmatmul.mubr.bf16.gmra.mrb[0].mxu0 %v424
        %v571 = vpop.f32.mrb[0].mxu0
        %v572 = vadd.f32 %v383, %v571
        %v573 = vpop.f32.mrb[0].mxu0
        %v574 = vpop.f32.mrb[0].mxu0
        %v575 = vadd.f32 %v383, %v574
        %v576 = vpop.f32.mrb[0].mxu0
        %577 = vdwg.mxu0
        %vm578 = vcmp.gt.f32.partialorder %v516, 0.0
        %vm579 = vcmp.gt.f32.partialorder %v519, 0.0
        %vm580 = vcmp.gt.f32.partialorder %v524, 0.0
        %vm581 = vcmp.gt.f32.partialorder %v527, 0.0
        %vm582 = vcmp.gt.f32.partialorder %v532, 0.0
        %vm583 = vcmp.gt.f32.partialorder %v535, 0.0
        %vm584 = vcmp.gt.f32.partialorder %v540, 0.0
        %vm585 = vcmp.gt.f32.partialorder %v543, 0.0
        %vm586 = vcmp.gt.f32.partialorder %v548, 0.0
        %vm587 = vcmp.gt.f32.partialorder %v551, 0.0
        %vm588 = vcmp.gt.f32.partialorder %v556, 0.0
        %vm589 = vcmp.gt.f32.partialorder %v559, 0.0
        %vm590 = vcmp.gt.f32.partialorder %v564, 0.0
        %vm591 = vcmp.gt.f32.partialorder %v567, 0.0
        %vm592 = vcmp.gt.f32.partialorder %v572, 0.0
        %vm593 = vcmp.gt.f32.partialorder %v575, 0.0
        %v594 = vmul.f32 %v516, 0.01
        %v595 = vmul.f32 %v519, 0.01
        %v596 = vmul.f32 %v524, 0.01
        %v597 = vmul.f32 %v527, 0.01
        %v598 = vmul.f32 %v532, 0.01
        %v599 = vmul.f32 %v535, 0.01
        %v600 = vmul.f32 %v540, 0.01
        %v601 = vmul.f32 %v543, 0.01
        %v602 = vmul.f32 %v548, 0.01
        %v603 = vmul.f32 %v551, 0.01
        %v604 = vmul.f32 %v556, 0.01
        %v605 = vmul.f32 %v559, 0.01
        %v606 = vmul.f32 %v564, 0.01
        %v607 = vmul.f32 %v567, 0.01
        %v608 = vmul.f32 %v572, 0.01
        %v609 = vmul.f32 %v575, 0.01
        %v610 = vsel %vm578, %v516, %v594
        %v611 = vsel %vm579, %v519, %v595
        %v612 = vsel %vm580, %v524, %v596
        %v613 = vsel %vm581, %v527, %v597
        %v614 = vsel %vm582, %v532, %v598
        %v615 = vsel %vm583, %v535, %v599
        %v616 = vsel %vm584, %v540, %v600
        %v617 = vsel %vm585, %v543, %v601
        %v618 = vsel %vm586, %v548, %v602
        %v619 = vsel %vm587, %v551, %v603
        %v620 = vsel %vm588, %v556, %v604
        %v621 = vsel %vm589, %v559, %v605
        %v622 = vsel %vm590, %v564, %v606
        %v623 = vsel %vm591, %v567, %v607
        %v624 = vsel %vm592, %v572, %v608
        %v625 = vsel %vm593, %v575, %v609
        %v626 = vpack.c.bf16 %v611, %v610
        %v627 = vpack.c.bf16 %v613, %v612
        %v628 = vpack.c.bf16 %v615, %v614
        %v629 = vpack.c.bf16 %v617, %v616
        %v630 = vpack.c.bf16 %v619, %v618
        %v631 = vpack.c.bf16 %v621, %v620
        %v632 = vpack.c.bf16 %v623, %v622
        %v633 = vpack.c.bf16 %v625, %v624
        %v634 = vld [vmem:[#allocation6] sm:$0xf]
        %v635 = vld [vmem:[#allocation6 + $0x4] sm:$0xf]
        %v636 = vld [vmem:[#allocation6 + $0x8] sm:$0xf]
        %v637 = vld [vmem:[#allocation6 + $0xc] sm:$0xf]
        %v638 = vld [vmem:[#allocation6 + $0x10] sm:$0xf]
        %v639 = vld [vmem:[#allocation6 + $0x14] sm:$0xf]
        %v640 = vld [vmem:[#allocation6 + $0x18] sm:$0xf]
        %v641 = vld [vmem:[#allocation6 + $0x1c] sm:$0xf]
        %v642 = vld [vmem:[#allocation6 + $0x20] sm:$0xf]
        %v643 = vld [vmem:[#allocation6 + $0x24] sm:$0xf]
        %v644 = vld [vmem:[#allocation6 + $0x28] sm:$0xf]
        %v645 = vld [vmem:[#allocation6 + $0x2c] sm:$0xf]
        %v646 = vld [vmem:[#allocation6 + $0x30] sm:$0xf]
        %v647 = vld [vmem:[#allocation6 + $0x34] sm:$0xf]
        %v648 = vld [vmem:[#allocation6 + $0x38] sm:$0xf]
        %v649 = vld [vmem:[#allocation6 + $0x3c] sm:$0xf]
        %v650 = vld [vmem:[%s4] sm:$0x1]
        %v652 = vlaneseq
        %v653 = vshrl.u32 %v652, 7
        %v654 = vsub.s32 0, %v653
        %v655 = vrot.slane %v650, %v654
        %v673 = vunpack.c.l.b16 %v634
        %v674 = vunpack.c.l.b16 %v635
        %v675 = vunpack.c.l.b16 %v636
        %v676 = vunpack.c.l.b16 %v637
        %v677 = vunpack.c.l.b16 %v638
        %v678 = vunpack.c.l.b16 %v639
        %v679 = vunpack.c.l.b16 %v640
        %v680 = vunpack.c.l.b16 %v641
        %v681 = vunpack.c.l.b16 %v642
        %v682 = vunpack.c.l.b16 %v643
        %v683 = vunpack.c.l.b16 %v644
        %v684 = vunpack.c.l.b16 %v645
        %v685 = vunpack.c.l.b16 %v646
        %v686 = vunpack.c.l.b16 %v647
        %v687 = vunpack.c.l.b16 %v648
        %v688 = vunpack.c.l.b16 %v649
        %v689 = vpack.c.b16 %v674, %v673
        %v690 = vpack.c.b16 %v676, %v675
        %v691 = vpack.c.b16 %v678, %v677
        %v692 = vpack.c.b16 %v680, %v679
        %v693 = vpack.c.b16 %v682, %v681
        %v694 = vpack.c.b16 %v684, %v683
        %v695 = vpack.c.b16 %v686, %v685
        %v696 = vpack.c.b16 %v688, %v687
        %705 = vmatprep.subr.bf16.mxu0 0
        %706 = vmatpush1.bf16.msra.mxu0 %v689
        %707 = vmatprep.subr.bf16.mxu0 0
        %708 = vmatpush1.bf16.msra.mxu0 %v690
        %709 = vmatprep.subr.bf16.mxu0 0
        %710 = vmatpush1.bf16.msra.mxu0 %v691
        %711 = vmatprep.subr.bf16.mxu0 0
        %712 = vmatpush1.bf16.msra.mxu0 %v692
        %713 = vmatprep.subr.bf16.mxu0 0
        %714 = vmatpush1.bf16.msra.mxu0 %v693
        %715 = vmatprep.subr.bf16.mxu0 0
        %716 = vmatpush1.bf16.msra.mxu0 %v694
        %717 = vmatprep.subr.bf16.mxu0 0
        %718 = vmatpush1.bf16.msra.mxu0 %v695
        %719 = vmatprep.subr.bf16.mxu0 0
        %720 = vmatpush1.bf16.msra.mxu0 %v696
        %721 = vmatprep.subr.bf16.mxu0 0
        %722 = vmatpush1.bf16.msra.mxu0 0
        %723 = vmatprep.subr.bf16.mxu0 0
        %724 = vmatpush1.bf16.msra.mxu0 0
        %725 = vmatprep.subr.bf16.mxu0 0
        %726 = vmatpush1.bf16.msra.mxu0 0
        %727 = vmatprep.subr.bf16.mxu0 0
        %728 = vmatpush1.bf16.msra.mxu0 0
        %729 = vmatprep.subr.bf16.mxu0 0
        %730 = vmatpush1.bf16.msra.mxu0 0
        %731 = vmatprep.subr.bf16.mxu0 0
        %732 = vmatpush1.bf16.msra.mxu0 0
        %733 = vmatprep.subr.bf16.mxu0 0
        %734 = vmatpush1.bf16.msra.mxu0 0
        %735 = vmatprep.subr.bf16.mxu0 0
        %736 = vmatpush1.bf16.msra.mxu0 0
        %737 = vmatprep.mubr.bf16.mxu0 0
        %738 = vmatmul.mubr.bf16.gmra.mrb[0].mxu0 %v626
        %v739 = vpop.f32.mrb[0].mxu0
        %v740 = vadd.f32 %v655, %v739
        %v741 = vpop.f32.mrb[0].mxu0
        %v742 = vpop.f32.mrb[0].mxu0
        %v743 = vadd.f32 %v655, %v742
        %v744 = vpop.f32.mrb[0].mxu0
        %745 = vmatprep.mubr.bf16.mxu0 0
        %746 = vmatmul.mubr.bf16.gmra.mrb[0].mxu0 %v627
        %v747 = vpop.f32.mrb[0].mxu0
        %v748 = vadd.f32 %v655, %v747
        %v749 = vpop.f32.mrb[0].mxu0
        %v750 = vpop.f32.mrb[0].mxu0
        %v751 = vadd.f32 %v655, %v750
        %v752 = vpop.f32.mrb[0].mxu0
        %753 = vmatprep.mubr.bf16.mxu0 0
        %754 = vmatmul.mubr.bf16.gmra.mrb[0].mxu0 %v628
        %v755 = vpop.f32.mrb[0].mxu0
        %v756 = vadd.f32 %v655, %v755
        %v757 = vpop.f32.mrb[0].mxu0
        %v758 = vpop.f32.mrb[0].mxu0
        %v759 = vadd.f32 %v655, %v758
        %v760 = vpop.f32.mrb[0].mxu0
        %761 = vmatprep.mubr.bf16.mxu0 0
        %762 = vmatmul.mubr.bf16.gmra.mrb[0].mxu0 %v629
        %v763 = vpop.f32.mrb[0].mxu0
        %v764 = vadd.f32 %v655, %v763
        %v765 = vpop.f32.mrb[0].mxu0
        %v766 = vpop.f32.mrb[0].mxu0
        %v767 = vadd.f32 %v655, %v766
        %v768 = vpop.f32.mrb[0].mxu0
        %769 = vmatprep.mubr.bf16.mxu0 0
        %770 = vmatmul.mubr.bf16.gmra.mrb[0].mxu0 %v630
        %v771 = vpop.f32.mrb[0].mxu0
        %v772 = vadd.f32 %v655, %v771
        %v773 = vpop.f32.mrb[0].mxu0
        %v774 = vpop.f32.mrb[0].mxu0
        %v775 = vadd.f32 %v655, %v774
        %v776 = vpop.f32.mrb[0].mxu0
        %777 = vmatprep.mubr.bf16.mxu0 0
        %778 = vmatmul.mubr.bf16.gmra.mrb[0].mxu0 %v631
        %v779 = vpop.f32.mrb[0].mxu0
        %v780 = vadd.f32 %v655, %v779
        %v781 = vpop.f32.mrb[0].mxu0
        %v782 = vpop.f32.mrb[0].mxu0
        %v783 = vadd.f32 %v655, %v782
        %v784 = vpop.f32.mrb[0].mxu0
        %785 = vmatprep.mubr.bf16.mxu0 0
        %786 = vmatmul.mubr.bf16.gmra.mrb[0].mxu0 %v632
        %v787 = vpop.f32.mrb[0].mxu0
        %v788 = vadd.f32 %v655, %v787
        %v789 = vpop.f32.mrb[0].mxu0
        %v790 = vpop.f32.mrb[0].mxu0
        %v791 = vadd.f32 %v655, %v790
        %v792 = vpop.f32.mrb[0].mxu0
        %793 = vmatprep.mubr.bf16.mxu0 0
        %794 = vmatmul.mubr.bf16.gmra.mrb[0].mxu0 %v633
        %v795 = vpop.f32.mrb[0].mxu0
        %v796 = vadd.f32 %v655, %v795
        %v797 = vpop.f32.mrb[0].mxu0
        %v798 = vpop.f32.mrb[0].mxu0
        %v799 = vadd.f32 %v655, %v798
        %v800 = vpop.f32.mrb[0].mxu0
        %801 = vdwg.mxu0
        %vm802 = vcmp.gt.f32.partialorder %v740, 0.0
        %vm803 = vcmp.gt.f32.partialorder %v743, 0.0
        %vm804 = vcmp.gt.f32.partialorder %v748, 0.0
        %vm805 = vcmp.gt.f32.partialorder %v751, 0.0
        %vm806 = vcmp.gt.f32.partialorder %v756, 0.0
        %vm807 = vcmp.gt.f32.partialorder %v759, 0.0
        %vm808 = vcmp.gt.f32.partialorder %v764, 0.0
        %vm809 = vcmp.gt.f32.partialorder %v767, 0.0
        %vm810 = vcmp.gt.f32.partialorder %v772, 0.0
        %vm811 = vcmp.gt.f32.partialorder %v775, 0.0
        %vm812 = vcmp.gt.f32.partialorder %v780, 0.0
        %vm813 = vcmp.gt.f32.partialorder %v783, 0.0
        %vm814 = vcmp.gt.f32.partialorder %v788, 0.0
        %vm815 = vcmp.gt.f32.partialorder %v791, 0.0
        %vm816 = vcmp.gt.f32.partialorder %v796, 0.0
        %vm817 = vcmp.gt.f32.partialorder %v799, 0.0
        %v818 = vmul.f32 %v740, 0.01
        %v819 = vmul.f32 %v743, 0.01
        %v820 = vmul.f32 %v748, 0.01
        %v821 = vmul.f32 %v751, 0.01
        %v822 = vmul.f32 %v756, 0.01
        %v823 = vmul.f32 %v759, 0.01
        %v824 = vmul.f32 %v764, 0.01
        %v825 = vmul.f32 %v767, 0.01
        %v826 = vmul.f32 %v772, 0.01
        %v827 = vmul.f32 %v775, 0.01
        %v828 = vmul.f32 %v780, 0.01
        %v829 = vmul.f32 %v783, 0.01
        %v830 = vmul.f32 %v788, 0.01
        %v831 = vmul.f32 %v791, 0.01
        %v832 = vmul.f32 %v796, 0.01
        %v833 = vmul.f32 %v799, 0.01
        %v834 = vsel %vm802, %v740, %v818
        %v835 = vsel %vm803, %v743, %v819
        %v836 = vsel %vm804, %v748, %v820
        %v837 = vsel %vm805, %v751, %v821
        %v838 = vsel %vm806, %v756, %v822
        %v839 = vsel %vm807, %v759, %v823
        %v840 = vsel %vm808, %v764, %v824
        %v841 = vsel %vm809, %v767, %v825
        %v842 = vsel %vm810, %v772, %v826
        %v843 = vsel %vm811, %v775, %v827
        %v844 = vsel %vm812, %v780, %v828
        %v845 = vsel %vm813, %v783, %v829
        %v846 = vsel %vm814, %v788, %v830
        %v847 = vsel %vm815, %v791, %v831
        %v848 = vsel %vm816, %v796, %v832
        %v849 = vsel %vm817, %v799, %v833
        %v850 = vpack.c.bf16 %v835, %v834
        %v851 = vpack.c.bf16 %v837, %v836
        %v852 = vpack.c.bf16 %v839, %v838
        %v853 = vpack.c.bf16 %v841, %v840
        %v854 = vpack.c.bf16 %v843, %v842
        %v855 = vpack.c.bf16 %v845, %v844
        %v856 = vpack.c.bf16 %v847, %v846
        %v857 = vpack.c.bf16 %v849, %v848
        %v858 = vld [vmem:[#allocation7] sm:$0xf]
        %v859 = vld [vmem:[#allocation7 + $0x4] sm:$0xf]
        %v860 = vld [vmem:[#allocation7 + $0x8] sm:$0xf]
        %v861 = vld [vmem:[#allocation7 + $0xc] sm:$0xf]
        %v862 = vld [vmem:[#allocation7 + $0x10] sm:$0xf]
        %v863 = vld [vmem:[#allocation7 + $0x14] sm:$0xf]
        %v864 = vld [vmem:[#allocation7 + $0x18] sm:$0xf]
        %v865 = vld [vmem:[#allocation7 + $0x1c] sm:$0xf]
        %v866 = vld [vmem:[#allocation7 + $0x20] sm:$0xf]
        %v867 = vld [vmem:[#allocation7 + $0x24] sm:$0xf]
        %v868 = vld [vmem:[#allocation7 + $0x28] sm:$0xf]
        %v869 = vld [vmem:[#allocation7 + $0x2c] sm:$0xf]
        %v870 = vld [vmem:[#allocation7 + $0x30] sm:$0xf]
        %v871 = vld [vmem:[#allocation7 + $0x34] sm:$0xf]
        %v872 = vld [vmem:[#allocation7 + $0x38] sm:$0xf]
        %v873 = vld [vmem:[#allocation7 + $0x3c] sm:$0xf]
        %v874 = vld [vmem:[%s6] sm:$0x1]
        %v876 = vlaneseq
        %v877 = vshrl.u32 %v876, 7
        %v878 = vsub.s32 0, %v877
        %v879 = vrot.slane %v874, %v878
        %v897 = vunpack.c.l.b16 %v858
        %v898 = vunpack.c.l.b16 %v859
        %v899 = vunpack.c.l.b16 %v860
        %v900 = vunpack.c.l.b16 %v861
        %v901 = vunpack.c.l.b16 %v862
        %v902 = vunpack.c.l.b16 %v863
        %v903 = vunpack.c.l.b16 %v864
        %v904 = vunpack.c.l.b16 %v865
        %v905 = vunpack.c.l.b16 %v866
        %v906 = vunpack.c.l.b16 %v867
        %v907 = vunpack.c.l.b16 %v868
        %v908 = vunpack.c.l.b16 %v869
        %v909 = vunpack.c.l.b16 %v870
        %v910 = vunpack.c.l.b16 %v871
        %v911 = vunpack.c.l.b16 %v872
        %v912 = vunpack.c.l.b16 %v873
        %v913 = vpack.c.b16 %v898, %v897
        %v914 = vpack.c.b16 %v900, %v899
        %v915 = vpack.c.b16 %v902, %v901
        %v916 = vpack.c.b16 %v904, %v903
        %v917 = vpack.c.b16 %v906, %v905
        %v918 = vpack.c.b16 %v908, %v907
        %v919 = vpack.c.b16 %v910, %v909
        %v920 = vpack.c.b16 %v912, %v911
        %929 = vmatprep.subr.bf16.mxu0 0
        %930 = vmatpush1.bf16.msra.mxu0 %v913
        %931 = vmatprep.subr.bf16.mxu0 0
        %932 = vmatpush1.bf16.msra.mxu0 %v914
        %933 = vmatprep.subr.bf16.mxu0 0
        %934 = vmatpush1.bf16.msra.mxu0 %v915
        %935 = vmatprep.subr.bf16.mxu0 0
        %936 = vmatpush1.bf16.msra.mxu0 %v916
        %937 = vmatprep.subr.bf16.mxu0 0
        %938 = vmatpush1.bf16.msra.mxu0 %v917
        %939 = vmatprep.subr.bf16.mxu0 0
        %940 = vmatpush1.bf16.msra.mxu0 %v918
        %941 = vmatprep.subr.bf16.mxu0 0
        %942 = vmatpush1.bf16.msra.mxu0 %v919
        %943 = vmatprep.subr.bf16.mxu0 0
        %944 = vmatpush1.bf16.msra.mxu0 %v920
        %945 = vmatprep.subr.bf16.mxu0 0
        %946 = vmatpush1.bf16.msra.mxu0 0
        %947 = vmatprep.subr.bf16.mxu0 0
        %948 = vmatpush1.bf16.msra.mxu0 0
        %949 = vmatprep.subr.bf16.mxu0 0
        %950 = vmatpush1.bf16.msra.mxu0 0
        %951 = vmatprep.subr.bf16.mxu0 0
        %952 = vmatpush1.bf16.msra.mxu0 0
        %953 = vmatprep.subr.bf16.mxu0 0
        %954 = vmatpush1.bf16.msra.mxu0 0
        %955 = vmatprep.subr.bf16.mxu0 0
        %956 = vmatpush1.bf16.msra.mxu0 0
        %957 = vmatprep.subr.bf16.mxu0 0
        %958 = vmatpush1.bf16.msra.mxu0 0
        %959 = vmatprep.subr.bf16.mxu0 0
        %960 = vmatpush1.bf16.msra.mxu0 0
        %961 = vmatprep.mubr.bf16.mxu0 0
        %962 = vmatmul.mubr.bf16.gmra.mrb[0].mxu0 %v850
        %v963 = vpop.f32.mrb[0].mxu0
        %v964 = vadd.f32 %v879, %v963
        %v965 = vpop.f32.mrb[0].mxu0
        %v966 = vpop.f32.mrb[0].mxu0
        %v967 = vadd.f32 %v879, %v966
        %v968 = vpop.f32.mrb[0].mxu0
        %969 = vmatprep.mubr.bf16.mxu0 0
        %970 = vmatmul.mubr.bf16.gmra.mrb[0].mxu0 %v851
        %v971 = vpop.f32.mrb[0].mxu0
        %v972 = vadd.f32 %v879, %v971
        %v973 = vpop.f32.mrb[0].mxu0
        %v974 = vpop.f32.mrb[0].mxu0
        %v975 = vadd.f32 %v879, %v974
        %v976 = vpop.f32.mrb[0].mxu0
        %977 = vmatprep.mubr.bf16.mxu0 0
        %978 = vmatmul.mubr.bf16.gmra.mrb[0].mxu0 %v852
        %v979 = vpop.f32.mrb[0].mxu0
        %v980 = vadd.f32 %v879, %v979
        %v981 = vpop.f32.mrb[0].mxu0
        %v982 = vpop.f32.mrb[0].mxu0
        %v983 = vadd.f32 %v879, %v982
        %v984 = vpop.f32.mrb[0].mxu0
        %985 = vmatprep.mubr.bf16.mxu0 0
        %986 = vmatmul.mubr.bf16.gmra.mrb[0].mxu0 %v853
        %v987 = vpop.f32.mrb[0].mxu0
        %v988 = vadd.f32 %v879, %v987
        %v989 = vpop.f32.mrb[0].mxu0
        %v990 = vpop.f32.mrb[0].mxu0
        %v991 = vadd.f32 %v879, %v990
        %v992 = vpop.f32.mrb[0].mxu0
        %993 = vmatprep.mubr.bf16.mxu0 0
        %994 = vmatmul.mubr.bf16.gmra.mrb[0].mxu0 %v854
        %v995 = vpop.f32.mrb[0].mxu0
        %v996 = vadd.f32 %v879, %v995
        %v997 = vpop.f32.mrb[0].mxu0
        %v998 = vpop.f32.mrb[0].mxu0
        %v999 = vadd.f32 %v879, %v998
        %v1000 = vpop.f32.mrb[0].mxu0
        %1001 = vmatprep.mubr.bf16.mxu0 0
        %1002 = vmatmul.mubr.bf16.gmra.mrb[0].mxu0 %v855
        %v1003 = vpop.f32.mrb[0].mxu0
        %v1004 = vadd.f32 %v879, %v1003
        %v1005 = vpop.f32.mrb[0].mxu0
        %v1006 = vpop.f32.mrb[0].mxu0
        %v1007 = vadd.f32 %v879, %v1006
        %v1008 = vpop.f32.mrb[0].mxu0
        %1009 = vmatprep.mubr.bf16.mxu0 0
        %1010 = vmatmul.mubr.bf16.gmra.mrb[0].mxu0 %v856
        %v1011 = vpop.f32.mrb[0].mxu0
        %v1012 = vadd.f32 %v879, %v1011
        %v1013 = vpop.f32.mrb[0].mxu0
        %v1014 = vpop.f32.mrb[0].mxu0
        %v1015 = vadd.f32 %v879, %v1014
        %v1016 = vpop.f32.mrb[0].mxu0
        %1017 = vmatprep.mubr.bf16.mxu0 0
        %1018 = vmatmul.mubr.bf16.gmra.mrb[0].mxu0 %v857
        %v1019 = vpop.f32.mrb[0].mxu0
        %v1020 = vadd.f32 %v879, %v1019
        %v1021 = vpop.f32.mrb[0].mxu0
        %v1022 = vpop.f32.mrb[0].mxu0
        %v1023 = vadd.f32 %v879, %v1022
        %v1024 = vpop.f32.mrb[0].mxu0
        %1025 = vdwg.mxu0
        %vm1026 = vcmask 64512
        %1027 = vst.msk [vmem:[%s343] sm:$0xff] %vm1026, %v964
        %1028 = vst.msk [vmem:[%s343 + $0x8] sm:$0xff] %vm1026, %v967
        %1029 = vst.msk [vmem:[%s343 + $0x10] sm:$0xff] %vm1026, %v972
        %1030 = vst.msk [vmem:[%s343 + $0x18] sm:$0xff] %vm1026, %v975
        %1031 = vst.msk [vmem:[%s343 + $0x20] sm:$0xff] %vm1026, %v980
        %1032 = vst.msk [vmem:[%s343 + $0x28] sm:$0xff] %vm1026, %v983
        %1033 = vst.msk [vmem:[%s343 + $0x30] sm:$0xff] %vm1026, %v988
        %1034 = vst.msk [vmem:[%s343 + $0x38] sm:$0xff] %vm1026, %v991
        %1035 = vst.msk [vmem:[%s343 + $0x40] sm:$0xff] %vm1026, %v996
        %1036 = vst.msk [vmem:[%s343 + $0x48] sm:$0xff] %vm1026, %v999
        %1037 = vst.msk [vmem:[%s343 + $0x50] sm:$0xff] %vm1026, %v1004
        %1038 = vst.msk [vmem:[%s343 + $0x58] sm:$0xff] %vm1026, %v1007
        %1039 = vst.msk [vmem:[%s343 + $0x60] sm:$0xff] %vm1026, %v1012
        %1040 = vst.msk [vmem:[%s343 + $0x68] sm:$0xff] %vm1026, %v1015
        %1041 = vst.msk [vmem:[%s343 + $0x70] sm:$0xff] %vm1026, %v1020
        %1042 = vst.msk [vmem:[%s343 + $0x78] sm:$0xff] %vm1026, %v1023
        %s1043 = smul.u32 16, %s23
        %p1044 = scmp.lt.s32.totalorder %s1043, 31
        %s1045 = scalar_select %p1044, %s1043, 31
        %s1046 = smul.addr %s1045, 8
        %s1047 = scalar_lea.vmem %s7, %s1046
        // Predicated region
        $region65: #{tpu_custom_call.1} parent=47 // pred_check
          %p1048 = pneg %p193
        $region66: #{tpu_custom_call.1} parent=47 // pred_check_branch
          %1050 = sbr.rel (%p1048) target = $region68
        $region67: #{tpu_custom_call.1} parent=47 // pred_region
          %s1051 = smul.u32 16, %s23
        $region68: #{tpu_custom_call.1} parent=47 // pred_fallthru
          _
      $region48: #{tpu_custom_call.1} parent=5 // pred_fallthru
        _
      %p1052 = scmp.le.s32.totalorder 2, %s18
      // Predicated region
      $region69: #{tpu_custom_call.1} parent=5 // pred_check
        %p1053 = pneg %p1052
      $region70: #{tpu_custom_call.1} parent=5 // pred_check_branch
        %1055 = sbr.rel (%p1053) target = $region72
      $region71: #{tpu_custom_call.1} parent=5 // pred_region
        %s1056 = ssub.s32 %s18, 2
        // Predicated region
        $region73: #{tpu_custom_call.1} parent=71 // pred_check
          %p1057 = pneg %p199
        $region74: #{tpu_custom_call.1} parent=71 // pred_check_branch
          %1059 = sbr.rel (%p1057) target = $region76
        $region75: #{tpu_custom_call.1} parent=71 // pred_region
          %s1060 = smul.u32 16, %s24
          %p1061 = scmp.lt.s32.totalorder %s1060, 31
          %s1062 = scalar_select %p1061, %s1060, 31
          %s1063 = smul.addr %s1062, 8
          %s1064 = scalar_lea.vmem %s7, %s1063
        $region76: #{tpu_custom_call.1} parent=71 // pred_fallthru
          _
      $region72: #{tpu_custom_call.1} parent=5 // pred_fallthru
        _
    $region6: #{tpu_custom_call.1} parent=1 // loop_footer
      %s22 = sadd.s32 1, %s18
    $region7: #{tpu_custom_call.1} parent=1 // loop_footer_branch
      %17 = sbr.rel target = $region3
    $region8: #{tpu_custom_call.1} parent=1 // loop_exit
      _
    %1065 = vsyncpa [#allocation3], 1
    %s1066 = scalar_lea.sflag [#allocation3], 1
    %1067 = vsyncpa %s1066, 1
    %1068 = vsyncpa [#allocation5], 1
    %1069 = vsyncpa [#allocation8], 1

</llo_original>
